<compile_context>
chip_gen: v6e
topology: v6e:2x2x1
jax: 0.10.0
libtpu: 0.0.40
codegen_flags: <defaults>
</compile_context>

<pallas_src>
import functools

import jax
import jax.numpy as jnp
from jax.experimental import pallas as pl
from jax.experimental.pallas import tpu as pltpu

HEAD_LANE = 256   # pad fused head width to the 256-wide MXU of v6e/v7x


def _round_up(n, m):
    return ((n + m - 1) // m) * m


def _vmem_capacity_bytes():
    try:
        return int(pltpu.get_tpu_info().vmem_capacity_bytes)
    except Exception:
        return 64 * 1024 * 1024   # conservative fallback (v7x per-TC VMEM)


def fast_net_kernel(x_ref, w1_ref, b1_ref, w2_ref, b2_ref, wh_ref, bh_ref,
                    head_ref, *, compute_dtype):
    # In-kernel cast of the activation tile (f32 HBM -> bf16 MXU operand):
    # avoids an extra wrapper-side HBM pass over x; the cast is free VPU
    # filler under the MXU-bound dots.
    x = x_ref[...].astype(compute_dtype)
    # fast_head: Linear -> ReLU -> Linear -> ReLU (f32 accumulate, f32 bias)
    h = jnp.dot(x, w1_ref[...], preferred_element_type=jnp.float32) + b1_ref[...]
    h = jnp.maximum(h, 0.0).astype(compute_dtype)
    h = jnp.dot(h, w2_ref[...], preferred_element_type=jnp.float32) + b2_ref[...]
    h = jnp.maximum(h, 0.0).astype(compute_dtype)
    # Fused classification + box-regression head: one lane-dense matmul,
    # columns [0, nc+1) are logits, [nc+1, 5*(nc+1)) are flat loc, rest pad.
    head_ref[...] = (
        jnp.dot(h, wh_ref[...], preferred_element_type=jnp.float32) + bh_ref[...]
    ).astype(head_ref.dtype)


def prepare_params(params, *, compute_dtype=jnp.bfloat16):
    """One-time preprocessing, outside the per-call path:
      * fuse Linear1/Linear2 into a single lane-dense head weight,
      * zero-pad its width to a multiple of HEAD_LANE,
      * cast matmul weights to the compute dtype ONCE (a per-call f32->bf16
        cast of W1 would cost more HBM traffic than the kernel's W1 fetch).
    Biases stay f32 (added to the f32 MXU accumulator).
    """
    w1, b1, w2, b2, w3, b3, w4, b4 = params
    n_cls_p1 = w3.shape[1]                                # num_classes + 1
    n_head = 5 * n_cls_p1                                 # logits + 4*loc cols
    n_pad = _round_up(n_head, HEAD_LANE)

    w_head = jnp.concatenate([w3, w4], axis=1)            # (channel, 5*(nc+1))
    b_head = jnp.concatenate([b3, b4], axis=1)
    if n_pad > n_head:
        w_head = jnp.pad(w_head, ((0, 0), (0, n_pad - n_head)))
        b_head = jnp.pad(b_head, ((0, 0), (0, n_pad - n_head)))

    prepared = (w1.astype(compute_dtype), b1.astype(jnp.float32),
                w2.astype(compute_dtype), b2.astype(jnp.float32),
                w_head.astype(compute_dtype), b_head.astype(jnp.float32))
    return prepared, n_cls_p1


def fast_net_forward(x, prepared, *, n_cls_p1, block_b=None,
                     compute_dtype=jnp.bfloat16, single_buffer_weights=True):
    """x: (B, C, H, W) float32. Returns (fast_logits, fast_loc)."""
    B = x.shape[0]
    x2d = x.reshape(B, -1).astype(jnp.float32)            # x.view(x.shape[0], -1)
    w1c, b1, w2c, b2, whc, bh = prepared
    channel_in, channel = w1c.shape
    n_pad = whc.shape[1]
    n_head = 5 * n_cls_p1

    # --- batch tiling, generation aware --------------------------------------
    vmem_cap = _vmem_capacity_bytes()
    if block_b is None:
        block_b = 512 if vmem_cap >= (96 << 20) else 256  # v5e/v6e vs v7x
    tb = min(_round_up(block_b, 8), _round_up(B, 8))
    b_pad = _round_up(B, tb)
    grid = (b_pad // tb,)
    if b_pad > B:
        x2d = jnp.pad(x2d, ((0, b_pad - B), (0, 0)))      # padded rows dropped below

    # --- VMEM budget & cost hint ----------------------------------------------
    w_itemsize = jnp.dtype(compute_dtype).itemsize
    weight_bytes = ((channel_in * channel + channel * channel + channel * n_pad)
                    * w_itemsize + (2 * channel + n_pad) * 4)
    weight_bufs = 1 if single_buffer_weights else 2
    act_bytes = 2 * tb * channel_in * 4                   # double-buffered f32 x tile
    out_bytes = 2 * tb * n_pad * 4                        # double-buffered f32 out tile
    need = weight_bufs * weight_bytes + act_bytes + out_bytes
    vmem_limit = int(min(vmem_cap - (8 << 20), max(need + (4 << 20), 16 << 20)))

    flops = 2 * b_pad * (channel_in * channel + channel * channel + channel * n_pad)
    bytes_accessed = (x2d.size * 4
                      + (w1c.size + w2c.size + whc.size) * w_itemsize
                      + (b1.size + b2.size + bh.size) * 4
                      + b_pad * n_pad * 4)
    cost = pl.CostEstimate(flops=flops, transcendentals=0,
                           bytes_accessed=bytes_accessed)

    # --- BlockSpecs -----------------------------------------------------------
    def const_spec(shape):
        # Constant index_map: operand is DMA'd once and stays resident in VMEM.
        if single_buffer_weights:
            return pl.BlockSpec(shape, lambda i: (0, 0),
                                pipeline_mode=pl.Buffered(1))
        return pl.BlockSpec(shape, lambda i: (0, 0))

    in_specs = [
        # activations: tiled along the batch (proposal) axis, f32 in HBM
        pl.BlockSpec((tb, channel_in), lambda i: (i, 0)),
        const_spec((channel_in, channel)),
        const_spec((1, channel)),
        const_spec((channel, channel)),
        const_spec((1, channel)),
        const_spec((channel, n_pad)),
        const_spec((1, n_pad)),
    ]

    head = pl.pallas_call(
        functools.partial(fast_net_kernel, compute_dtype=compute_dtype),
        out_shape=jax.ShapeDtypeStruct((b_pad, n_pad), jnp.float32),
        grid=grid,
        in_specs=in_specs,
        out_specs=pl.BlockSpec((tb, n_pad), lambda i: (i, 0)),
        compiler_params=pltpu.CompilerParams(
            dimension_semantics=("parallel",),            # split batch over TCs
            vmem_limit_bytes=vmem_limit,
        ),
        cost_estimate=cost,
    )(x2d, w1c, b1, w2c, b2, whc, bh)

    head = head[:B]                                        # drop padded rows
    fast_logits = head[:, :n_cls_p1]
    fast_loc = head[:, n_cls_p1:n_head].reshape(B, n_cls_p1, 4)  # view(B, -1, 4)
    return fast_logits, fast_loc


def fast_net_reference(x, params):
    """Pure-JAX f32 reference (mirrors the PyTorch forward)."""
    w1, b1, w2, b2, w3, b3, w4, b4 = params
    x2d = x.reshape(x.shape[0], -1)
    h = jnp.maximum(x2d @ w1 + b1, 0.0)
    h = jnp.maximum(h @ w2 + b2, 0.0)
    logits = h @ w3 + b3
    loc = (h @ w4 + b4).reshape(x.shape[0], -1, 4)
    return logits, loc


def init_params(key, num_classes, channel_in, channel):
    """Deterministic synthetic parameters (shapes match the PyTorch module).

    Weights are stored transposed relative to nn.Linear: (in, out).
    Biases stored as (1, out) rows for clean broadcasting on TPU.
    """
    k1, k2, k3, k4, k5, k6 = jax.random.split(key, 6)
    lim1 = 1.0 / jnp.sqrt(channel_in)
    lim2 = 1.0 / jnp.sqrt(channel)
    w1 = jax.random.uniform(k1, (channel_in, channel), jnp.float32, -lim1, lim1)
    b1 = jax.random.uniform(k2, (1, channel), jnp.float32, -lim1, lim1)
    w2 = jax.random.uniform(k3, (channel, channel), jnp.float32, -lim2, lim2)
    b2 = jax.random.uniform(k4, (1, channel), jnp.float32, -lim2, lim2)
    # Linear1: normal(std=0.01), bias 0 ; Linear2: normal(std=0.001), bias 0
    w3 = 0.01 * jax.random.normal(k5, (channel, num_classes + 1), jnp.float32)
    b3 = jnp.zeros((1, num_classes + 1), jnp.float32)
    w4 = 0.001 * jax.random.normal(k6, (channel, (num_classes + 1) * 4), jnp.float32)
    b4 = jnp.zeros((1, (num_classes + 1) * 4), jnp.float32)
    return (w1, b1, w2, b2, w3, b3, w4, b4)


if __name__ == "__main__":
    num_classes = 4
    B, C, H, W = 2, 4, 16, 16
    channel_in = C * H * W        # 1024
    channel = 128

    key = jax.random.PRNGKey(0)
    kx, kp = jax.random.split(key)
    x = jax.random.normal(kx, (B, C, H, W), dtype=jnp.float32)
    params = init_params(kp, num_classes, channel_in, channel)
    prepared, n_cls_p1 = prepare_params(params)

    def run(single_buffer_weights):
        fwd = jax.jit(functools.partial(
            fast_net_forward, n_cls_p1=n_cls_p1,
            single_buffer_weights=single_buffer_weights))
        out = fwd(x, prepared)
        jax.block_until_ready(out)
        return out

    try:
        fast_logits, fast_loc = run(True)
    except Exception:
        # Fallback if this JAX build rejects single-buffered pipeline_mode.
        fast_logits, fast_loc = run(False)

    assert fast_logits.shape == (B, num_classes + 1)
    assert fast_loc.shape == (B, num_classes + 1, 4)

    # Validate against the pure-JAX f32 reference (bf16-tolerant bounds).
    ref_logits, ref_loc = fast_net_reference(x, params)
    assert jnp.allclose(fast_logits, ref_logits, atol=5e-2, rtol=5e-2)
    assert jnp.allclose(fast_loc, ref_loc, atol=5e-2, rtol=5e-2)
    print("KERNEL_OK")
</pallas_src>

<mosaic_0001>
module attributes {stable_mosaic.version = 11 : i64} {
  func.func @fast_net_kernel(%arg0: i32, %arg1: memref<8x1024xf32, #tpu.memory_space<vmem>>, %arg2: memref<1024x128xbf16, #tpu.memory_space<vmem>>, %arg3: memref<1x128xf32, #tpu.memory_space<vmem>>, %arg4: memref<128x128xbf16, #tpu.memory_space<vmem>>, %arg5: memref<1x128xf32, #tpu.memory_space<vmem>>, %arg6: memref<128x256xbf16, #tpu.memory_space<vmem>>, %arg7: memref<1x256xf32, #tpu.memory_space<vmem>>, %arg8: memref<8x256xf32, #tpu.memory_space<vmem>>) attributes {dimension_semantics = [#tpu.dimension_semantics<parallel>], iteration_bounds = array<i64: 1>, scalar_prefetch = 0 : i64, scratch_operands = 0 : i64, tpu.core_type = #tpu.core_type<tc>, window_params = [{transform_indices = @transform_0, window_bounds = array<i64: 8, 1024>}, {pipeline_mode = #tpu.pipeline_mode<synchronous>, transform_indices = @transform_1, window_bounds = array<i64: 1024, 128>}, {pipeline_mode = #tpu.pipeline_mode<synchronous>, transform_indices = @transform_2, window_bounds = array<i64: 1, 128>}, {pipeline_mode = #tpu.pipeline_mode<synchronous>, transform_indices = @transform_3, window_bounds = array<i64: 128, 128>}, {pipeline_mode = #tpu.pipeline_mode<synchronous>, transform_indices = @transform_4, window_bounds = array<i64: 1, 128>}, {pipeline_mode = #tpu.pipeline_mode<synchronous>, transform_indices = @transform_5, window_bounds = array<i64: 128, 256>}, {pipeline_mode = #tpu.pipeline_mode<synchronous>, transform_indices = @transform_6, window_bounds = array<i64: 1, 256>}, {transform_indices = @transform_7, window_bounds = array<i64: 8, 256>}]} {
    %c0 = arith.constant 0 : index
    %c0_0 = arith.constant 0 : index
    %0 = vector.load %arg1[%c0, %c0_0] : memref<8x1024xf32, #tpu.memory_space<vmem>>, vector<8x1024xf32>
    %1 = arith.truncf %0 : vector<8x1024xf32> to vector<8x1024xbf16>
    %c0_1 = arith.constant 0 : index
    %c0_2 = arith.constant 0 : index
    %2 = vector.load %arg2[%c0_1, %c0_2] : memref<1024x128xbf16, #tpu.memory_space<vmem>>, vector<1024x128xbf16>
    %cst = arith.constant dense<0.000000e+00> : vector<8x128xf32>
    %3 = tpu.matmul %1, %2, %cst {dimension_numbers = #tpu.dot_dimension_numbers<[1], [0], [0], [1], [0, 0, 1, 1], [], []>} : vector<8x1024xbf16>, vector<1024x128xbf16>, vector<8x128xf32> -> vector<8x128xf32>
    %c0_3 = arith.constant 0 : index
    %c0_4 = arith.constant 0 : index
    %4 = vector.load %arg3[%c0_3, %c0_4] : memref<1x128xf32, #tpu.memory_space<vmem>>, vector<1x128xf32>
    %5 = vector.broadcast %4 : vector<1x128xf32> to vector<8x128xf32>
    %6 = arith.addf %3, %5 : vector<8x128xf32>
    %cst_5 = arith.constant 0.000000e+00 : f32
    %7 = vector.broadcast %cst_5 : f32 to vector<8x128xf32>
    %8 = arith.maximumf %6, %7 : vector<8x128xf32>
    %9 = arith.truncf %8 : vector<8x128xf32> to vector<8x128xbf16>
    %c0_6 = arith.constant 0 : index
    %c0_7 = arith.constant 0 : index
    %10 = vector.load %arg4[%c0_6, %c0_7] : memref<128x128xbf16, #tpu.memory_space<vmem>>, vector<128x128xbf16>
    %cst_8 = arith.constant dense<0.000000e+00> : vector<8x128xf32>
    %11 = tpu.matmul %9, %10, %cst_8 {dimension_numbers = #tpu.dot_dimension_numbers<[1], [0], [0], [1], [0, 0, 1, 1], [], []>} : vector<8x128xbf16>, vector<128x128xbf16>, vector<8x128xf32> -> vector<8x128xf32>
    %c0_9 = arith.constant 0 : index
    %c0_10 = arith.constant 0 : index
    %12 = vector.load %arg5[%c0_9, %c0_10] : memref<1x128xf32, #tpu.memory_space<vmem>>, vector<1x128xf32>
    %13 = vector.broadcast %12 : vector<1x128xf32> to vector<8x128xf32>
    %14 = arith.addf %11, %13 : vector<8x128xf32>
    %cst_11 = arith.constant 0.000000e+00 : f32
    %15 = vector.broadcast %cst_11 : f32 to vector<8x128xf32>
    %16 = arith.maximumf %14, %15 : vector<8x128xf32>
    %17 = arith.truncf %16 : vector<8x128xf32> to vector<8x128xbf16>
    %c0_12 = arith.constant 0 : index
    %c0_13 = arith.constant 0 : index
    %18 = vector.load %arg6[%c0_12, %c0_13] : memref<128x256xbf16, #tpu.memory_space<vmem>>, vector<128x256xbf16>
    %cst_14 = arith.constant dense<0.000000e+00> : vector<8x256xf32>
    %19 = tpu.matmul %17, %18, %cst_14 {dimension_numbers = #tpu.dot_dimension_numbers<[1], [0], [0], [1], [0, 0, 1, 1], [], []>} : vector<8x128xbf16>, vector<128x256xbf16>, vector<8x256xf32> -> vector<8x256xf32>
    %c0_15 = arith.constant 0 : index
    %c0_16 = arith.constant 0 : index
    %20 = vector.load %arg7[%c0_15, %c0_16] : memref<1x256xf32, #tpu.memory_space<vmem>>, vector<1x256xf32>
    %21 = vector.broadcast %20 : vector<1x256xf32> to vector<8x256xf32>
    %22 = arith.addf %19, %21 : vector<8x256xf32>
    %c0_17 = arith.constant 0 : index
    %c0_18 = arith.constant 0 : index
    %23 = vector.load %arg8[%c0_17, %c0_18] : memref<8x256xf32, #tpu.memory_space<vmem>>, vector<8x256xf32>
    tpu.vector_store %arg8[%c0_17, %c0_18], %22 {strides = array<i32>} : memref<8x256xf32, #tpu.memory_space<vmem>>, vector<8x256xf32>,
    return
  }
  func.func @transform_0(%arg0: i32) -> (i32, i32) {
    %c0_i32 = arith.constant 0 : i32
    %c0_i32_0 = arith.constant 0 : i32
    return %arg0, %c0_i32 : i32, i32
  }
  func.func @transform_1(%arg0: i32) -> (i32, i32) {
    %c0_i32 = arith.constant 0 : i32
    %c0_i32_0 = arith.constant 0 : i32
    %c0_i32_1 = arith.constant 0 : i32
    return %c0_i32, %c0_i32_0 : i32, i32
  }
  func.func @transform_2(%arg0: i32) -> (i32, i32) {
    %c0_i32 = arith.constant 0 : i32
    %c0_i32_0 = arith.constant 0 : i32
    %c0_i32_1 = arith.constant 0 : i32
    return %c0_i32, %c0_i32_0 : i32, i32
  }
  func.func @transform_3(%arg0: i32) -> (i32, i32) {
    %c0_i32 = arith.constant 0 : i32
    %c0_i32_0 = arith.constant 0 : i32
    %c0_i32_1 = arith.constant 0 : i32
    return %c0_i32, %c0_i32_0 : i32, i32
  }
  func.func @transform_4(%arg0: i32) -> (i32, i32) {
    %c0_i32 = arith.constant 0 : i32
    %c0_i32_0 = arith.constant 0 : i32
    %c0_i32_1 = arith.constant 0 : i32
    return %c0_i32, %c0_i32_0 : i32, i32
  }
  func.func @transform_5(%arg0: i32) -> (i32, i32) {
    %c0_i32 = arith.constant 0 : i32
    %c0_i32_0 = arith.constant 0 : i32
    %c0_i32_1 = arith.constant 0 : i32
    return %c0_i32, %c0_i32_0 : i32, i32
  }
  func.func @transform_6(%arg0: i32) -> (i32, i32) {
    %c0_i32 = arith.constant 0 : i32
    %c0_i32_0 = arith.constant 0 : i32
    %c0_i32_1 = arith.constant 0 : i32
    return %c0_i32, %c0_i32_0 : i32, i32
  }
  func.func @transform_7(%arg0: i32) -> (i32, i32) {
    %c0_i32 = arith.constant 0 : i32
    %c0_i32_0 = arith.constant 0 : i32
    return %arg0, %c0_i32 : i32, i32
  }
}

module attributes {stable_mosaic.version = 11 : i64} {
  func.func @fast_net_kernel(%arg0: i32, %arg1: memref<8x1024xf32, #tpu.memory_space<vmem>>, %arg2: memref<1024x128xbf16, #tpu.memory_space<vmem>>, %arg3: memref<1x128xf32, #tpu.memory_space<vmem>>, %arg4: memref<128x128xbf16, #tpu.memory_space<vmem>>, %arg5: memref<1x128xf32, #tpu.memory_space<vmem>>, %arg6: memref<128x256xbf16, #tpu.memory_space<vmem>>, %arg7: memref<1x256xf32, #tpu.memory_space<vmem>>, %arg8: memref<8x256xf32, #tpu.memory_space<vmem>>) attributes {dimension_semantics = [#tpu.dimension_semantics<parallel>], iteration_bounds = array<i64: 1>, scalar_prefetch = 0 : i64, scratch_operands = 0 : i64, tpu.core_type = #tpu.core_type<tc>, window_params = [{transform_indices = @transform_0, window_bounds = array<i64: 8, 1024>}, {pipeline_mode = #tpu.pipeline_mode<synchronous>, transform_indices = @transform_1, window_bounds = array<i64: 1024, 128>}, {pipeline_mode = #tpu.pipeline_mode<synchronous>, transform_indices = @transform_2, window_bounds = array<i64: 1, 128>}, {pipeline_mode = #tpu.pipeline_mode<synchronous>, transform_indices = @transform_3, window_bounds = array<i64: 128, 128>}, {pipeline_mode = #tpu.pipeline_mode<synchronous>, transform_indices = @transform_4, window_bounds = array<i64: 1, 128>}, {pipeline_mode = #tpu.pipeline_mode<synchronous>, transform_indices = @transform_5, window_bounds = array<i64: 128, 256>}, {pipeline_mode = #tpu.pipeline_mode<synchronous>, transform_indices = @transform_6, window_bounds = array<i64: 1, 256>}, {transform_indices = @transform_7, window_bounds = array<i64: 8, 256>}]} {
    %c0 = arith.constant 0 : index
    %c0_0 = arith.constant 0 : index
    %0 = vector.load %arg1[%c0, %c0_0] : memref<8x1024xf32, #tpu.memory_space<vmem>>, vector<8x1024xf32>
    %1 = arith.truncf %0 : vector<8x1024xf32> to vector<8x1024xbf16>
    %c0_1 = arith.constant 0 : index
    %c0_2 = arith.constant 0 : index
    %2 = vector.load %arg2[%c0_1, %c0_2] : memref<1024x128xbf16, #tpu.memory_space<vmem>>, vector<1024x128xbf16>
    %cst = arith.constant dense<0.000000e+00> : vector<8x128xf32>
    %3 = tpu.matmul %1, %2, %cst {dimension_numbers = #tpu.dot_dimension_numbers<[1], [0], [0], [1], [0, 0, 1, 1], [], []>} : vector<8x1024xbf16>, vector<1024x128xbf16>, vector<8x128xf32> -> vector<8x128xf32>
    %c0_3 = arith.constant 0 : index
    %c0_4 = arith.constant 0 : index
    %4 = vector.load %arg3[%c0_3, %c0_4] : memref<1x128xf32, #tpu.memory_space<vmem>>, vector<1x128xf32>
    %5 = vector.broadcast %4 : vector<1x128xf32> to vector<8x128xf32>
    %6 = arith.addf %3, %5 : vector<8x128xf32>
    %cst_5 = arith.constant 0.000000e+00 : f32
    %7 = vector.broadcast %cst_5 : f32 to vector<8x128xf32>
    %8 = arith.maximumf %6, %7 : vector<8x128xf32>
    %9 = arith.truncf %8 : vector<8x128xf32> to vector<8x128xbf16>
    %c0_6 = arith.constant 0 : index
    %c0_7 = arith.constant 0 : index
    %10 = vector.load %arg4[%c0_6, %c0_7] : memref<128x128xbf16, #tpu.memory_space<vmem>>, vector<128x128xbf16>
    %cst_8 = arith.constant dense<0.000000e+00> : vector<8x128xf32>
    %11 = tpu.matmul %9, %10, %cst_8 {dimension_numbers = #tpu.dot_dimension_numbers<[1], [0], [0], [1], [0, 0, 1, 1], [], []>} : vector<8x128xbf16>, vector<128x128xbf16>, vector<8x128xf32> -> vector<8x128xf32>
    %c0_9 = arith.constant 0 : index
    %c0_10 = arith.constant 0 : index
    %12 = vector.load %arg5[%c0_9, %c0_10] : memref<1x128xf32, #tpu.memory_space<vmem>>, vector<1x128xf32>
    %13 = vector.broadcast %12 : vector<1x128xf32> to vector<8x128xf32>
    %14 = arith.addf %11, %13 : vector<8x128xf32>
    %cst_11 = arith.constant 0.000000e+00 : f32
    %15 = vector.broadcast %cst_11 : f32 to vector<8x128xf32>
    %16 = arith.maximumf %14, %15 : vector<8x128xf32>
    %17 = arith.truncf %16 : vector<8x128xf32> to vector<8x128xbf16>
    %c0_12 = arith.constant 0 : index
    %c0_13 = arith.constant 0 : index
    %18 = vector.load %arg6[%c0_12, %c0_13] : memref<128x256xbf16, #tpu.memory_space<vmem>>, vector<128x256xbf16>
    %cst_14 = arith.constant dense<0.000000e+00> : vector<8x256xf32>
    %19 = tpu.matmul %17, %18, %cst_14 {dimension_numbers = #tpu.dot_dimension_numbers<[1], [0], [0], [1], [0, 0, 1, 1], [], []>} : vector<8x128xbf16>, vector<128x256xbf16>, vector<8x256xf32> -> vector<8x256xf32>
    %c0_15 = arith.constant 0 : index
    %c0_16 = arith.constant 0 : index
    %20 = vector.load %arg7[%c0_15, %c0_16] : memref<1x256xf32, #tpu.memory_space<vmem>>, vector<1x256xf32>
    %21 = vector.broadcast %20 : vector<1x256xf32> to vector<8x256xf32>
    %22 = arith.addf %19, %21 : vector<8x256xf32>
    %c0_17 = arith.constant 0 : index
    %c0_18 = arith.constant 0 : index
    %23 = vector.load %arg8[%c0_17, %c0_18] : memref<8x256xf32, #tpu.memory_space<vmem>>, vector<8x256xf32>
    tpu.vector_store %arg8[%c0_17, %c0_18], %22 {strides = array<i32>} : memref<8x256xf32, #tpu.memory_space<vmem>>, vector<8x256xf32>,
    return
  }
  func.func @transform_0(%arg0: i32) -> (i32, i32) {
    %c0_i32 = arith.constant 0 : i32
    %c0_i32_0 = arith.constant 0 : i32
    return %arg0, %c0_i32 : i32, i32
  }
  func.func @transform_1(%arg0: i32) -> (i32, i32) {
    %c0_i32 = arith.constant 0 : i32
    %c0_i32_0 = arith.constant 0 : i32
    %c0_i32_1 = arith.constant 0 : i32
    return %c0_i32, %c0_i32_0 : i32, i32
  }
  func.func @transform_2(%arg0: i32) -> (i32, i32) {
    %c0_i32 = arith.constant 0 : i32
    %c0_i32_0 = arith.constant 0 : i32
    %c0_i32_1 = arith.constant 0 : i32
    return %c0_i32, %c0_i32_0 : i32, i32
  }
  func.func @transform_3(%arg0: i32) -> (i32, i32) {
    %c0_i32 = arith.constant 0 : i32
    %c0_i32_0 = arith.constant 0 : i32
    %c0_i32_1 = arith.constant 0 : i32
    return %c0_i32, %c0_i32_0 : i32, i32
  }
  func.func @transform_4(%arg0: i32) -> (i32, i32) {
    %c0_i32 = arith.constant 0 : i32
    %c0_i32_0 = arith.constant 0 : i32
    %c0_i32_1 = arith.constant 0 : i32
    return %c0_i32, %c0_i32_0 : i32, i32
  }
  func.func @transform_5(%arg0: i32) -> (i32, i32) {
    %c0_i32 = arith.constant 0 : i32
    %c0_i32_0 = arith.constant 0 : i32
    %c0_i32_1 = arith.constant 0 : i32
    return %c0_i32, %c0_i32_0 : i32, i32
  }
  func.func @transform_6(%arg0: i32) -> (i32, i32) {
    %c0_i32 = arith.constant 0 : i32
    %c0_i32_0 = arith.constant 0 : i32
    %c0_i32_1 = arith.constant 0 : i32
    return %c0_i32, %c0_i32_0 : i32, i32
  }
  func.func @transform_7(%arg0: i32) -> (i32, i32) {
    %c0_i32 = arith.constant 0 : i32
    %c0_i32_0 = arith.constant 0 : i32
    return %arg0, %c0_i32 : i32, i32
  }
}

</mosaic_0001>

<llo_original>
// kernel: fast_net_forward.1
$region0: #{fast_net_forward.1}
  #allocation0 [shape = 'u32[]', space=smem, size = 0x4, offset = 0x4, fixed_abs, tag = 'smem constant byte address 0x4 - core index']
  #allocation1 [shape = 'u32[144,128]{1,0:T(1,128)}', space=vmem, size = 0x12000, scoped, tag = 'internal scratch']
  %s0 = inlined_call_operand.vmem [shape: f32[8,1024], index: 0, kind: input, shape index: {}]
  %s1 = inlined_call_operand.hbm [shape: bf16[1024,128], index: 1, kind: input, shape index: {}]
  %s2 = inlined_call_operand.vmem [shape: f32[1,128], index: 2, kind: input, shape index: {}]
  %s3 = inlined_call_operand.vmem [shape: bf16[128,128], index: 3, kind: input, shape index: {}]
  %s4 = inlined_call_operand.vmem [shape: f32[1,128], index: 4, kind: input, shape index: {}]
  %s5 = inlined_call_operand.vmem [shape: bf16[128,256], index: 5, kind: input, shape index: {}]
  %s6 = inlined_call_operand.vmem [shape: f32[1,256], index: 6, kind: input, shape index: {}]
  %s7 = inlined_call_operand.vmem [shape: f32[8,256], index: 7, kind: output, shape index: {}]
  %s8 = sld [smem:[#allocation0]]
  $region42: #{fast_net_forward.1} parent=0
    _
  %s10 = ssub.s32 1, %s8
  %s11 = scalar_select 0, %s10, %s8
  $region1: #{fast_net_forward.1} parent=0
    #allocation2 [shape = 'u8[262144]{0}', space=vmem, size = 0x40000, scoped, tag = 'input window, operand 1, single buffered']
    #allocation3 [shape = 's32[1]{0}', space=sflag, size = 0x4, scoped, tag = 'scoped memory for fast_net_forward.1']
    %12 = vsyncpa [#allocation3], 0
    // Predicated region
    $region2: #{fast_net_forward.1} parent=1 // pred_check
      _
    $region3: #{fast_net_forward.1} parent=1 // pred_check_branch
      %14 = sbr.rel (0) target = $region5
    $region4: #{fast_net_forward.1} parent=1 // pred_region
      _
    $region5: #{fast_net_forward.1} parent=1 // pred_fallthru
      _
    // Predicated region
    $region6: #{fast_net_forward.1} parent=1 // pred_check
      _
    $region7: #{fast_net_forward.1} parent=1 // pred_check_branch
      %16 = sbr.rel (0) target = $region9
    $region8: #{fast_net_forward.1} parent=1 // pred_region
      %s18 = ssub.s32 8192, 8192
      %19 = vsyncadd [#allocation3], %s18
      %s20 = sshll.u32 [#allocation2], 4
      %s21 = int_to_ptr.vmem [resolvable:$true] %s20
      %26 = dma.hbm_to_vmem [thread:$0]  %s1, 8192, %s21, [#allocation3], 64, 64, 4
    $region9: #{fast_net_forward.1} parent=1 // pred_fallthru
      _
    // Predicated region
    $region10: #{fast_net_forward.1} parent=1 // pred_check
      _
    $region11: #{fast_net_forward.1} parent=1 // pred_check_branch
      %28 = sbr.rel (0) target = $region13
    $region12: #{fast_net_forward.1} parent=1 // pred_region
      _
    $region13: #{fast_net_forward.1} parent=1 // pred_fallthru
      _
    // Predicated region
    $region14: #{fast_net_forward.1} parent=1 // pred_check
      _
    $region15: #{fast_net_forward.1} parent=1 // pred_check_branch
      %30 = sbr.rel (0) target = $region17
    $region16: #{fast_net_forward.1} parent=1 // pred_region
      _
    $region17: #{fast_net_forward.1} parent=1 // pred_fallthru
      _
    // Predicated region
    $region18: #{fast_net_forward.1} parent=1 // pred_check
      _
    $region19: #{fast_net_forward.1} parent=1 // pred_check_branch
      %32 = sbr.rel (0) target = $region21
    $region20: #{fast_net_forward.1} parent=1 // pred_region
      _
    $region21: #{fast_net_forward.1} parent=1 // pred_fallthru
      _
    // Predicated region
    $region22: #{fast_net_forward.1} parent=1 // pred_check
      _
    $region23: #{fast_net_forward.1} parent=1 // pred_check_branch
      %34 = sbr.rel (0) target = $region25
    $region24: #{fast_net_forward.1} parent=1 // pred_region
      _
    $region25: #{fast_net_forward.1} parent=1 // pred_fallthru
      _
    // Predicated region
    $region26: #{fast_net_forward.1} parent=1 // pred_check
      _
    $region27: #{fast_net_forward.1} parent=1 // pred_check_branch
      %36 = sbr.rel (0) target = $region29
    $region28: #{fast_net_forward.1} parent=1 // pred_region
      _
    $region29: #{fast_net_forward.1} parent=1 // pred_fallthru
      _
    // Predicated region
    $region30: #{fast_net_forward.1} parent=1 // pred_check
      _
    $region31: #{fast_net_forward.1} parent=1 // pred_check_branch
      %38 = sbr.rel (0) target = $region33
    $region32: #{fast_net_forward.1} parent=1 // pred_region
      %39 = dma.done [#allocation3], 8192
    $region33: #{fast_net_forward.1} parent=1 // pred_fallthru
      _
    %v41 = vld [vmem:[%s0] sm:$0xff]
    %v42 = vld [vmem:[%s0 + $0x8] sm:$0xff]
    %v43 = vld [vmem:[%s0 + $0x10] sm:$0xff]
    %v44 = vld [vmem:[%s0 + $0x18] sm:$0xff]
    %v45 = vld [vmem:[%s0 + $0x20] sm:$0xff]
    %v46 = vld [vmem:[%s0 + $0x28] sm:$0xff]
    %v47 = vld [vmem:[%s0 + $0x30] sm:$0xff]
    %v48 = vld [vmem:[%s0 + $0x38] sm:$0xff]
    %v49 = vpack.c.bf16 %v41, %v41
    %v50 = vpack.c.bf16 %v42, %v42
    %v51 = vpack.c.bf16 %v43, %v43
    %v52 = vpack.c.bf16 %v44, %v44
    %v53 = vpack.c.bf16 %v45, %v45
    %v54 = vpack.c.bf16 %v46, %v46
    %v55 = vpack.c.bf16 %v47, %v47
    %v56 = vpack.c.bf16 %v48, %v48
    %v57 = vld [vmem:[#allocation2] sm:$0xf]
    %v58 = vld [vmem:[#allocation2 + $0x4] sm:$0xf]
    %v59 = vld [vmem:[#allocation2 + $0x8] sm:$0xf]
    %v60 = vld [vmem:[#allocation2 + $0xc] sm:$0xf]
    %v61 = vld [vmem:[#allocation2 + $0x10] sm:$0xf]
    %v62 = vld [vmem:[#allocation2 + $0x14] sm:$0xf]
    %v63 = vld [vmem:[#allocation2 + $0x18] sm:$0xf]
    %v64 = vld [vmem:[#allocation2 + $0x1c] sm:$0xf]
    %v65 = vld [vmem:[#allocation2 + $0x20] sm:$0xf]
    %v66 = vld [vmem:[#allocation2 + $0x24] sm:$0xf]
    %v67 = vld [vmem:[#allocation2 + $0x28] sm:$0xf]
    %v68 = vld [vmem:[#allocation2 + $0x2c] sm:$0xf]
    %v69 = vld [vmem:[#allocation2 + $0x30] sm:$0xf]
    %v70 = vld [vmem:[#allocation2 + $0x34] sm:$0xf]
    %v71 = vld [vmem:[#allocation2 + $0x38] sm:$0xf]
    %v72 = vld [vmem:[#allocation2 + $0x3c] sm:$0xf]
    %v73 = vld [vmem:[#allocation2 + $0x40] sm:$0xf]
    %v74 = vld [vmem:[#allocation2 + $0x44] sm:$0xf]
    %v75 = vld [vmem:[#allocation2 + $0x48] sm:$0xf]
    %v76 = vld [vmem:[#allocation2 + $0x4c] sm:$0xf]
    %v77 = vld [vmem:[#allocation2 + $0x50] sm:$0xf]
    %v78 = vld [vmem:[#allocation2 + $0x54] sm:$0xf]
    %v79 = vld [vmem:[#allocation2 + $0x58] sm:$0xf]
    %v80 = vld [vmem:[#allocation2 + $0x5c] sm:$0xf]
    %v81 = vld [vmem:[#allocation2 + $0x60] sm:$0xf]
    %v82 = vld [vmem:[#allocation2 + $0x64] sm:$0xf]
    %v83 = vld [vmem:[#allocation2 + $0x68] sm:$0xf]
    %v84 = vld [vmem:[#allocation2 + $0x6c] sm:$0xf]
    %v85 = vld [vmem:[#allocation2 + $0x70] sm:$0xf]
    %v86 = vld [vmem:[#allocation2 + $0x74] sm:$0xf]
    %v87 = vld [vmem:[#allocation2 + $0x78] sm:$0xf]
    %v88 = vld [vmem:[#allocation2 + $0x7c] sm:$0xf]
    %v89 = vld [vmem:[#allocation2 + $0x80] sm:$0xf]
    %v90 = vld [vmem:[#allocation2 + $0x84] sm:$0xf]
    %v91 = vld [vmem:[#allocation2 + $0x88] sm:$0xf]
    %v92 = vld [vmem:[#allocation2 + $0x8c] sm:$0xf]
    %v93 = vld [vmem:[#allocation2 + $0x90] sm:$0xf]
    %v94 = vld [vmem:[#allocation2 + $0x94] sm:$0xf]
    %v95 = vld [vmem:[#allocation2 + $0x98] sm:$0xf]
    %v96 = vld [vmem:[#allocation2 + $0x9c] sm:$0xf]
    %v97 = vld [vmem:[#allocation2 + $0xa0] sm:$0xf]
    %v98 = vld [vmem:[#allocation2 + $0xa4] sm:$0xf]
    %v99 = vld [vmem:[#allocation2 + $0xa8] sm:$0xf]
    %v100 = vld [vmem:[#allocation2 + $0xac] sm:$0xf]
    %v101 = vld [vmem:[#allocation2 + $0xb0] sm:$0xf]
    %v102 = vld [vmem:[#allocation2 + $0xb4] sm:$0xf]
    %v103 = vld [vmem:[#allocation2 + $0xb8] sm:$0xf]
    %v104 = vld [vmem:[#allocation2 + $0xbc] sm:$0xf]
    %v105 = vld [vmem:[#allocation2 + $0xc0] sm:$0xf]
    %v106 = vld [vmem:[#allocation2 + $0xc4] sm:$0xf]
    %v107 = vld [vmem:[#allocation2 + $0xc8] sm:$0xf]
    %v108 = vld [vmem:[#allocation2 + $0xcc] sm:$0xf]
    %v109 = vld [vmem:[#allocation2 + $0xd0] sm:$0xf]
    %v110 = vld [vmem:[#allocation2 + $0xd4] sm:$0xf]
    %v111 = vld [vmem:[#allocation2 + $0xd8] sm:$0xf]
    %v112 = vld [vmem:[#allocation2 + $0xdc] sm:$0xf]
    %v113 = vld [vmem:[#allocation2 + $0xe0] sm:$0xf]
    %v114 = vld [vmem:[#allocation2 + $0xe4] sm:$0xf]
    %v115 = vld [vmem:[#allocation2 + $0xe8] sm:$0xf]
    %v116 = vld [vmem:[#allocation2 + $0xec] sm:$0xf]
    %v117 = vld [vmem:[#allocation2 + $0xf0] sm:$0xf]
    %v118 = vld [vmem:[#allocation2 + $0xf4] sm:$0xf]
    %v119 = vld [vmem:[#allocation2 + $0xf8] sm:$0xf]
    %v120 = vld [vmem:[#allocation2 + $0xfc] sm:$0xf]
    %v121 = vld [vmem:[#allocation2 + $0x100] sm:$0xf]
    %v122 = vld [vmem:[#allocation2 + $0x104] sm:$0xf]
    %v123 = vld [vmem:[#allocation2 + $0x108] sm:$0xf]
    %v124 = vld [vmem:[#allocation2 + $0x10c] sm:$0xf]
    %v125 = vld [vmem:[#allocation2 + $0x110] sm:$0xf]
    %v126 = vld [vmem:[#allocation2 + $0x114] sm:$0xf]
    %v127 = vld [vmem:[#allocation2 + $0x118] sm:$0xf]
    %v128 = vld [vmem:[#allocation2 + $0x11c] sm:$0xf]
    %v129 = vld [vmem:[#allocation2 + $0x120] sm:$0xf]
    %v130 = vld [vmem:[#allocation2 + $0x124] sm:$0xf]
    %v131 = vld [vmem:[#allocation2 + $0x128] sm:$0xf]
    %v132 = vld [vmem:[#allocation2 + $0x12c] sm:$0xf]
    %v133 = vld [vmem:[#allocation2 + $0x130] sm:$0xf]
    %v134 = vld [vmem:[#allocation2 + $0x134] sm:$0xf]
    %v135 = vld [vmem:[#allocation2 + $0x138] sm:$0xf]
    %v136 = vld [vmem:[#allocation2 + $0x13c] sm:$0xf]
    %v137 = vld [vmem:[#allocation2 + $0x140] sm:$0xf]
    %v138 = vld [vmem:[#allocation2 + $0x144] sm:$0xf]
    %v139 = vld [vmem:[#allocation2 + $0x148] sm:$0xf]
    %v140 = vld [vmem:[#allocation2 + $0x14c] sm:$0xf]
    %v141 = vld [vmem:[#allocation2 + $0x150] sm:$0xf]
    %v142 = vld [vmem:[#allocation2 + $0x154] sm:$0xf]
    %v143 = vld [vmem:[#allocation2 + $0x158] sm:$0xf]
    %v144 = vld [vmem:[#allocation2 + $0x15c] sm:$0xf]
    %v145 = vld [vmem:[#allocation2 + $0x160] sm:$0xf]
    %v146 = vld [vmem:[#allocation2 + $0x164] sm:$0xf]
    %v147 = vld [vmem:[#allocation2 + $0x168] sm:$0xf]
    %v148 = vld [vmem:[#allocation2 + $0x16c] sm:$0xf]
    %v149 = vld [vmem:[#allocation2 + $0x170] sm:$0xf]
    %v150 = vld [vmem:[#allocation2 + $0x174] sm:$0xf]
    %v151 = vld [vmem:[#allocation2 + $0x178] sm:$0xf]
    %v152 = vld [vmem:[#allocation2 + $0x17c] sm:$0xf]
    %v153 = vld [vmem:[#allocation2 + $0x180] sm:$0xf]
    %v154 = vld [vmem:[#allocation2 + $0x184] sm:$0xf]
    %v155 = vld [vmem:[#allocation2 + $0x188] sm:$0xf]
    %v156 = vld [vmem:[#allocation2 + $0x18c] sm:$0xf]
    %v157 = vld [vmem:[#allocation2 + $0x190] sm:$0xf]
    %v158 = vld [vmem:[#allocation2 + $0x194] sm:$0xf]
    %v159 = vld [vmem:[#allocation2 + $0x198] sm:$0xf]
    %v160 = vld [vmem:[#allocation2 + $0x19c] sm:$0xf]
    %v161 = vld [vmem:[#allocation2 + $0x1a0] sm:$0xf]
    %v162 = vld [vmem:[#allocation2 + $0x1a4] sm:$0xf]
    %v163 = vld [vmem:[#allocation2 + $0x1a8] sm:$0xf]
    %v164 = vld [vmem:[#allocation2 + $0x1ac] sm:$0xf]
    %v165 = vld [vmem:[#allocation2 + $0x1b0] sm:$0xf]
    %v166 = vld [vmem:[#allocation2 + $0x1b4] sm:$0xf]
    %v167 = vld [vmem:[#allocation2 + $0x1b8] sm:$0xf]
    %v168 = vld [vmem:[#allocation2 + $0x1bc] sm:$0xf]
    %v169 = vld [vmem:[#allocation2 + $0x1c0] sm:$0xf]
    %v170 = vld [vmem:[#allocation2 + $0x1c4] sm:$0xf]
    %v171 = vld [vmem:[#allocation2 + $0x1c8] sm:$0xf]
    %v172 = vld [vmem:[#allocation2 + $0x1cc] sm:$0xf]
    %v173 = vld [vmem:[#allocation2 + $0x1d0] sm:$0xf]
    %v174 = vld [vmem:[#allocation2 + $0x1d4] sm:$0xf]
    %v175 = vld [vmem:[#allocation2 + $0x1d8] sm:$0xf]
    %v176 = vld [vmem:[#allocation2 + $0x1dc] sm:$0xf]
    %v177 = vld [vmem:[#allocation2 + $0x1e0] sm:$0xf]
    %v178 = vld [vmem:[#allocation2 + $0x1e4] sm:$0xf]
    %v179 = vld [vmem:[#allocation2 + $0x1e8] sm:$0xf]
    %v180 = vld [vmem:[#allocation2 + $0x1ec] sm:$0xf]
    %v181 = vld [vmem:[#allocation2 + $0x1f0] sm:$0xf]
    %v182 = vld [vmem:[#allocation2 + $0x1f4] sm:$0xf]
    %v183 = vld [vmem:[#allocation2 + $0x1f8] sm:$0xf]
    %v184 = vld [vmem:[#allocation2 + $0x1fc] sm:$0xf]
    %v185 = vld [vmem:[%s2] sm:$0x1]
    %v187 = vlaneseq
    %v188 = vshrl.u32 %v187, 7
    %v189 = vsub.s32 0, %v188
    %v190 = vrot.slane %v185, %v189
    %v320 = vunpack.c.l.b16 %v57
    %v321 = vunpack.c.l.b16 %v58
    %v322 = vunpack.c.l.b16 %v59
    %v323 = vunpack.c.l.b16 %v60
    %v324 = vunpack.c.l.b16 %v61
    %v325 = vunpack.c.l.b16 %v62
    %v326 = vunpack.c.l.b16 %v63
    %v327 = vunpack.c.l.b16 %v64
    %v328 = vunpack.c.l.b16 %v65
    %v329 = vunpack.c.l.b16 %v66
    %v330 = vunpack.c.l.b16 %v67
    %v331 = vunpack.c.l.b16 %v68
    %v332 = vunpack.c.l.b16 %v69
    %v333 = vunpack.c.l.b16 %v70
    %v334 = vunpack.c.l.b16 %v71
    %v335 = vunpack.c.l.b16 %v72
    %v336 = vunpack.c.l.b16 %v73
    %v337 = vunpack.c.l.b16 %v74
    %v338 = vunpack.c.l.b16 %v75
    %v339 = vunpack.c.l.b16 %v76
    %v340 = vunpack.c.l.b16 %v77
    %v341 = vunpack.c.l.b16 %v78
    %v342 = vunpack.c.l.b16 %v79
    %v343 = vunpack.c.l.b16 %v80
    %v344 = vunpack.c.l.b16 %v81
    %v345 = vunpack.c.l.b16 %v82
    %v346 = vunpack.c.l.b16 %v83
    %v347 = vunpack.c.l.b16 %v84
    %v348 = vunpack.c.l.b16 %v85
    %v349 = vunpack.c.l.b16 %v86
    %v350 = vunpack.c.l.b16 %v87
    %v351 = vunpack.c.l.b16 %v88
    %v352 = vunpack.c.l.b16 %v89
    %v353 = vunpack.c.l.b16 %v90
    %v354 = vunpack.c.l.b16 %v91
    %v355 = vunpack.c.l.b16 %v92
    %v356 = vunpack.c.l.b16 %v93
    %v357 = vunpack.c.l.b16 %v94
    %v358 = vunpack.c.l.b16 %v95
    %v359 = vunpack.c.l.b16 %v96
    %v360 = vunpack.c.l.b16 %v97
    %v361 = vunpack.c.l.b16 %v98
    %v362 = vunpack.c.l.b16 %v99
    %v363 = vunpack.c.l.b16 %v100
    %v364 = vunpack.c.l.b16 %v101
    %v365 = vunpack.c.l.b16 %v102
    %v366 = vunpack.c.l.b16 %v103
    %v367 = vunpack.c.l.b16 %v104
    %v368 = vunpack.c.l.b16 %v105
    %v369 = vunpack.c.l.b16 %v106
    %v370 = vunpack.c.l.b16 %v107
    %v371 = vunpack.c.l.b16 %v108
    %v372 = vunpack.c.l.b16 %v109
    %v373 = vunpack.c.l.b16 %v110
    %v374 = vunpack.c.l.b16 %v111
    %v375 = vunpack.c.l.b16 %v112
    %v376 = vunpack.c.l.b16 %v113
    %v377 = vunpack.c.l.b16 %v114
    %v378 = vunpack.c.l.b16 %v115
    %v379 = vunpack.c.l.b16 %v116
    %v380 = vunpack.c.l.b16 %v117
    %v381 = vunpack.c.l.b16 %v118
    %v382 = vunpack.c.l.b16 %v119
    %v383 = vunpack.c.l.b16 %v120
    %v384 = vunpack.c.l.b16 %v121
    %v385 = vunpack.c.l.b16 %v122
    %v386 = vunpack.c.l.b16 %v123
    %v387 = vunpack.c.l.b16 %v124
    %v388 = vunpack.c.l.b16 %v125
    %v389 = vunpack.c.l.b16 %v126
    %v390 = vunpack.c.l.b16 %v127
    %v391 = vunpack.c.l.b16 %v128
    %v392 = vunpack.c.l.b16 %v129
    %v393 = vunpack.c.l.b16 %v130
    %v394 = vunpack.c.l.b16 %v131
    %v395 = vunpack.c.l.b16 %v132
    %v396 = vunpack.c.l.b16 %v133
    %v397 = vunpack.c.l.b16 %v134
    %v398 = vunpack.c.l.b16 %v135
    %v399 = vunpack.c.l.b16 %v136
    %v400 = vunpack.c.l.b16 %v137
    %v401 = vunpack.c.l.b16 %v138
    %v402 = vunpack.c.l.b16 %v139
    %v403 = vunpack.c.l.b16 %v140
    %v404 = vunpack.c.l.b16 %v141
    %v405 = vunpack.c.l.b16 %v142
    %v406 = vunpack.c.l.b16 %v143
    %v407 = vunpack.c.l.b16 %v144
    %v408 = vunpack.c.l.b16 %v145
    %v409 = vunpack.c.l.b16 %v146
    %v410 = vunpack.c.l.b16 %v147
    %v411 = vunpack.c.l.b16 %v148
    %v412 = vunpack.c.l.b16 %v149
    %v413 = vunpack.c.l.b16 %v150
    %v414 = vunpack.c.l.b16 %v151
    %v415 = vunpack.c.l.b16 %v152
    %v416 = vunpack.c.l.b16 %v153
    %v417 = vunpack.c.l.b16 %v154
    %v418 = vunpack.c.l.b16 %v155
    %v419 = vunpack.c.l.b16 %v156
    %v420 = vunpack.c.l.b16 %v157
    %v421 = vunpack.c.l.b16 %v158
    %v422 = vunpack.c.l.b16 %v159
    %v423 = vunpack.c.l.b16 %v160
    %v424 = vunpack.c.l.b16 %v161
    %v425 = vunpack.c.l.b16 %v162
    %v426 = vunpack.c.l.b16 %v163
    %v427 = vunpack.c.l.b16 %v164
    %v428 = vunpack.c.l.b16 %v165
    %v429 = vunpack.c.l.b16 %v166
    %v430 = vunpack.c.l.b16 %v167
    %v431 = vunpack.c.l.b16 %v168
    %v432 = vunpack.c.l.b16 %v169
    %v433 = vunpack.c.l.b16 %v170
    %v434 = vunpack.c.l.b16 %v171
    %v435 = vunpack.c.l.b16 %v172
    %v436 = vunpack.c.l.b16 %v173
    %v437 = vunpack.c.l.b16 %v174
    %v438 = vunpack.c.l.b16 %v175
    %v439 = vunpack.c.l.b16 %v176
    %v440 = vunpack.c.l.b16 %v177
    %v441 = vunpack.c.l.b16 %v178
    %v442 = vunpack.c.l.b16 %v179
    %v443 = vunpack.c.l.b16 %v180
    %v444 = vunpack.c.l.b16 %v181
    %v445 = vunpack.c.l.b16 %v182
    %v446 = vunpack.c.l.b16 %v183
    %v447 = vunpack.c.l.b16 %v184
    %v448 = vpack.c.b16 %v321, %v320
    %v449 = vpack.c.b16 %v323, %v322
    %v450 = vpack.c.b16 %v325, %v324
    %v451 = vpack.c.b16 %v327, %v326
    %v452 = vpack.c.b16 %v329, %v328
    %v453 = vpack.c.b16 %v331, %v330
    %v454 = vpack.c.b16 %v333, %v332
    %v455 = vpack.c.b16 %v335, %v334
    %v456 = vpack.c.b16 %v337, %v336
    %v457 = vpack.c.b16 %v339, %v338
    %v458 = vpack.c.b16 %v341, %v340
    %v459 = vpack.c.b16 %v343, %v342
    %v460 = vpack.c.b16 %v345, %v344
    %v461 = vpack.c.b16 %v347, %v346
    %v462 = vpack.c.b16 %v349, %v348
    %v463 = vpack.c.b16 %v351, %v350
    %v464 = vpack.c.b16 %v353, %v352
    %v465 = vpack.c.b16 %v355, %v354
    %v466 = vpack.c.b16 %v357, %v356
    %v467 = vpack.c.b16 %v359, %v358
    %v468 = vpack.c.b16 %v361, %v360
    %v469 = vpack.c.b16 %v363, %v362
    %v470 = vpack.c.b16 %v365, %v364
    %v471 = vpack.c.b16 %v367, %v366
    %v472 = vpack.c.b16 %v369, %v368
    %v473 = vpack.c.b16 %v371, %v370
    %v474 = vpack.c.b16 %v373, %v372
    %v475 = vpack.c.b16 %v375, %v374
    %v476 = vpack.c.b16 %v377, %v376
    %v477 = vpack.c.b16 %v379, %v378
    %v478 = vpack.c.b16 %v381, %v380
    %v479 = vpack.c.b16 %v383, %v382
    %v480 = vpack.c.b16 %v385, %v384
    %v481 = vpack.c.b16 %v387, %v386
    %v482 = vpack.c.b16 %v389, %v388
    %v483 = vpack.c.b16 %v391, %v390
    %v484 = vpack.c.b16 %v393, %v392
    %v485 = vpack.c.b16 %v395, %v394
    %v486 = vpack.c.b16 %v397, %v396
    %v487 = vpack.c.b16 %v399, %v398
    %v488 = vpack.c.b16 %v401, %v400
    %v489 = vpack.c.b16 %v403, %v402
    %v490 = vpack.c.b16 %v405, %v404
    %v491 = vpack.c.b16 %v407, %v406
    %v492 = vpack.c.b16 %v409, %v408
    %v493 = vpack.c.b16 %v411, %v410
    %v494 = vpack.c.b16 %v413, %v412
    %v495 = vpack.c.b16 %v415, %v414
    %v496 = vpack.c.b16 %v417, %v416
    %v497 = vpack.c.b16 %v419, %v418
    %v498 = vpack.c.b16 %v421, %v420
    %v499 = vpack.c.b16 %v423, %v422
    %v500 = vpack.c.b16 %v425, %v424
    %v501 = vpack.c.b16 %v427, %v426
    %v502 = vpack.c.b16 %v429, %v428
    %v503 = vpack.c.b16 %v431, %v430
    %v504 = vpack.c.b16 %v433, %v432
    %v505 = vpack.c.b16 %v435, %v434
    %v506 = vpack.c.b16 %v437, %v436
    %v507 = vpack.c.b16 %v439, %v438
    %v508 = vpack.c.b16 %v441, %v440
    %v509 = vpack.c.b16 %v443, %v442
    %v510 = vpack.c.b16 %v445, %v444
    %v511 = vpack.c.b16 %v447, %v446
    %576 = vmatprep.subr.bf16.mxu0 0
    %577 = vmatpush1.bf16.msra.mxu0 %v455
    %578 = vmatprep.subr.bf16.mxu0 0
    %579 = vmatpush1.bf16.msra.mxu0 %v454
    %580 = vmatprep.subr.bf16.mxu0 0
    %581 = vmatpush1.bf16.msra.mxu0 %v453
    %582 = vmatprep.subr.bf16.mxu0 0
    %583 = vmatpush1.bf16.msra.mxu0 %v452
    %584 = vmatprep.subr.bf16.mxu0 0
    %585 = vmatpush1.bf16.msra.mxu0 %v451
    %586 = vmatprep.subr.bf16.mxu0 0
    %587 = vmatpush1.bf16.msra.mxu0 %v450
    %588 = vmatprep.subr.bf16.mxu0 0
    %589 = vmatpush1.bf16.msra.mxu0 %v449
    %590 = vmatprep.subr.bf16.mxu0 0
    %591 = vmatpush1.bf16.msra.mxu0 %v448
    %592 = vmatprep.subr.bf16.mxu0 0
    %593 = vmatpush2.bf16.msra.mxu0 %v463
    %594 = vmatprep.subr.bf16.mxu0 0
    %595 = vmatpush2.bf16.msra.mxu0 %v462
    %596 = vmatprep.subr.bf16.mxu0 0
    %597 = vmatpush2.bf16.msra.mxu0 %v461
    %598 = vmatprep.subr.bf16.mxu0 0
    %599 = vmatpush2.bf16.msra.mxu0 %v460
    %600 = vmatprep.subr.bf16.mxu0 0
    %601 = vmatpush2.bf16.msra.mxu0 %v459
    %602 = vmatprep.subr.bf16.mxu0 0
    %603 = vmatpush2.bf16.msra.mxu0 %v458
    %604 = vmatprep.subr.bf16.mxu0 0
    %605 = vmatpush2.bf16.msra.mxu0 %v457
    %606 = vmatprep.subr.bf16.mxu0 0
    %607 = vmatpush2.bf16.msra.mxu0 %v456
    %608 = vmatprep.mubr.bf16.mxu0 %v50
    %609 = vmatmul.mubr.bf16.gmra.mxu0 %v49
    %v610 = vpop.f32.mrf.mxu0
    %v611 = vadd.f32 %v190, %v610
    %v612 = vpop.f32.mrf.mxu0
    %v613 = vpop.f32.mrf.mxu0
    %v614 = vpop.f32.mrf.mxu0
    %615 = vdwg.mxu0
    %616 = vmatprep.subr.bf16.mxu0 0
    %617 = vmatpush1.bf16.msra.mxu0 %v471
    %618 = vmatprep.subr.bf16.mxu0 0
    %619 = vmatpush1.bf16.msra.mxu0 %v470
    %620 = vmatprep.subr.bf16.mxu0 0
    %621 = vmatpush1.bf16.msra.mxu0 %v469
    %622 = vmatprep.subr.bf16.mxu0 0
    %623 = vmatpush1.bf16.msra.mxu0 %v468
    %624 = vmatprep.subr.bf16.mxu0 0
    %625 = vmatpush1.bf16.msra.mxu0 %v467
    %626 = vmatprep.subr.bf16.mxu0 0
    %627 = vmatpush1.bf16.msra.mxu0 %v466
    %628 = vmatprep.subr.bf16.mxu0 0
    %629 = vmatpush1.bf16.msra.mxu0 %v465
    %630 = vmatprep.subr.bf16.mxu0 0
    %631 = vmatpush1.bf16.msra.mxu0 %v464
    %632 = vmatprep.subr.bf16.mxu0 0
    %633 = vmatpush2.bf16.msra.mxu0 %v479
    %634 = vmatprep.subr.bf16.mxu0 0
    %635 = vmatpush2.bf16.msra.mxu0 %v478
    %636 = vmatprep.subr.bf16.mxu0 0
    %637 = vmatpush2.bf16.msra.mxu0 %v477
    %638 = vmatprep.subr.bf16.mxu0 0
    %639 = vmatpush2.bf16.msra.mxu0 %v476
    %640 = vmatprep.subr.bf16.mxu0 0
    %641 = vmatpush2.bf16.msra.mxu0 %v475
    %642 = vmatprep.subr.bf16.mxu0 0
    %643 = vmatpush2.bf16.msra.mxu0 %v474
    %644 = vmatprep.subr.bf16.mxu0 0
    %645 = vmatpush2.bf16.msra.mxu0 %v473
    %646 = vmatprep.subr.bf16.mxu0 0
    %647 = vmatpush2.bf16.msra.mxu0 %v472
    %648 = vmatprep.mubr.bf16.mxu0 %v52
    %649 = vmatmul.mubr.bf16.gmra.mxu0 %v51
    %v650 = vpop.f32.mrf.mxu0
    %v651 = vadd.f32 %v611, %v650
    %v652 = vpop.f32.mrf.mxu0
    %v653 = vpop.f32.mrf.mxu0
    %v654 = vpop.f32.mrf.mxu0
    %655 = vdwg.mxu0
    %656 = vmatprep.subr.bf16.mxu0 0
    %657 = vmatpush1.bf16.msra.mxu0 %v487
    %658 = vmatprep.subr.bf16.mxu0 0
    %659 = vmatpush1.bf16.msra.mxu0 %v486
    %660 = vmatprep.subr.bf16.mxu0 0
    %661 = vmatpush1.bf16.msra.mxu0 %v485
    %662 = vmatprep.subr.bf16.mxu0 0
    %663 = vmatpush1.bf16.msra.mxu0 %v484
    %664 = vmatprep.subr.bf16.mxu0 0
    %665 = vmatpush1.bf16.msra.mxu0 %v483
    %666 = vmatprep.subr.bf16.mxu0 0
    %667 = vmatpush1.bf16.msra.mxu0 %v482
    %668 = vmatprep.subr.bf16.mxu0 0
    %669 = vmatpush1.bf16.msra.mxu0 %v481
    %670 = vmatprep.subr.bf16.mxu0 0
    %671 = vmatpush1.bf16.msra.mxu0 %v480
    %672 = vmatprep.subr.bf16.mxu0 0
    %673 = vmatpush2.bf16.msra.mxu0 %v495
    %674 = vmatprep.subr.bf16.mxu0 0
    %675 = vmatpush2.bf16.msra.mxu0 %v494
    %676 = vmatprep.subr.bf16.mxu0 0
    %677 = vmatpush2.bf16.msra.mxu0 %v493
    %678 = vmatprep.subr.bf16.mxu0 0
    %679 = vmatpush2.bf16.msra.mxu0 %v492
    %680 = vmatprep.subr.bf16.mxu0 0
    %681 = vmatpush2.bf16.msra.mxu0 %v491
    %682 = vmatprep.subr.bf16.mxu0 0
    %683 = vmatpush2.bf16.msra.mxu0 %v490
    %684 = vmatprep.subr.bf16.mxu0 0
    %685 = vmatpush2.bf16.msra.mxu0 %v489
    %686 = vmatprep.subr.bf16.mxu0 0
    %687 = vmatpush2.bf16.msra.mxu0 %v488
    %688 = vmatprep.mubr.bf16.mxu0 %v54
    %689 = vmatmul.mubr.bf16.gmra.mxu0 %v53
    %v690 = vpop.f32.mrf.mxu0
    %v691 = vadd.f32 %v651, %v690
    %v692 = vpop.f32.mrf.mxu0
    %v693 = vpop.f32.mrf.mxu0
    %v694 = vpop.f32.mrf.mxu0
    %695 = vdwg.mxu0
    %696 = vmatprep.subr.bf16.mxu0 0
    %697 = vmatpush1.bf16.msra.mxu0 %v503
    %698 = vmatprep.subr.bf16.mxu0 0
    %699 = vmatpush1.bf16.msra.mxu0 %v502
    %700 = vmatprep.subr.bf16.mxu0 0
    %701 = vmatpush1.bf16.msra.mxu0 %v501
    %702 = vmatprep.subr.bf16.mxu0 0
    %703 = vmatpush1.bf16.msra.mxu0 %v500
    %704 = vmatprep.subr.bf16.mxu0 0
    %705 = vmatpush1.bf16.msra.mxu0 %v499
    %706 = vmatprep.subr.bf16.mxu0 0
    %707 = vmatpush1.bf16.msra.mxu0 %v498
    %708 = vmatprep.subr.bf16.mxu0 0
    %709 = vmatpush1.bf16.msra.mxu0 %v497
    %710 = vmatprep.subr.bf16.mxu0 0
    %711 = vmatpush1.bf16.msra.mxu0 %v496
    %712 = vmatprep.subr.bf16.mxu0 0
    %713 = vmatpush2.bf16.msra.mxu0 %v511
    %714 = vmatprep.subr.bf16.mxu0 0
    %715 = vmatpush2.bf16.msra.mxu0 %v510
    %716 = vmatprep.subr.bf16.mxu0 0
    %717 = vmatpush2.bf16.msra.mxu0 %v509
    %718 = vmatprep.subr.bf16.mxu0 0
    %719 = vmatpush2.bf16.msra.mxu0 %v508
    %720 = vmatprep.subr.bf16.mxu0 0
    %721 = vmatpush2.bf16.msra.mxu0 %v507
    %722 = vmatprep.subr.bf16.mxu0 0
    %723 = vmatpush2.bf16.msra.mxu0 %v506
    %724 = vmatprep.subr.bf16.mxu0 0
    %725 = vmatpush2.bf16.msra.mxu0 %v505
    %726 = vmatprep.subr.bf16.mxu0 0
    %727 = vmatpush2.bf16.msra.mxu0 %v504
    %728 = vmatprep.mubr.bf16.mxu0 %v56
    %729 = vmatmul.mubr.bf16.gmra.mxu0 %v55
    %v730 = vpop.f32.mrf.mxu0
    %v731 = vadd.f32 %v691, %v730
    %v732 = vpop.f32.mrf.mxu0
    %v733 = vpop.f32.mrf.mxu0
    %v734 = vpop.f32.mrf.mxu0
    %735 = vdwg.mxu0
    %v736 = vmax.f32 %v731, 0.0
    %v737 = vpack.c.bf16 %v736, %v736
    %v738 = vld [vmem:[%s3] sm:$0xf]
    %v739 = vld [vmem:[%s3 + $0x4] sm:$0xf]
    %v740 = vld [vmem:[%s3 + $0x8] sm:$0xf]
    %v741 = vld [vmem:[%s3 + $0xc] sm:$0xf]
    %v742 = vld [vmem:[%s3 + $0x10] sm:$0xf]
    %v743 = vld [vmem:[%s3 + $0x14] sm:$0xf]
    %v744 = vld [vmem:[%s3 + $0x18] sm:$0xf]
    %v745 = vld [vmem:[%s3 + $0x1c] sm:$0xf]
    %v746 = vld [vmem:[%s3 + $0x20] sm:$0xf]
    %v747 = vld [vmem:[%s3 + $0x24] sm:$0xf]
    %v748 = vld [vmem:[%s3 + $0x28] sm:$0xf]
    %v749 = vld [vmem:[%s3 + $0x2c] sm:$0xf]
    %v750 = vld [vmem:[%s3 + $0x30] sm:$0xf]
    %v751 = vld [vmem:[%s3 + $0x34] sm:$0xf]
    %v752 = vld [vmem:[%s3 + $0x38] sm:$0xf]
    %v753 = vld [vmem:[%s3 + $0x3c] sm:$0xf]
    %v754 = vld [vmem:[%s4] sm:$0x1]
    %v756 = vlaneseq
    %v757 = vshrl.u32 %v756, 7
    %v758 = vsub.s32 0, %v757
    %v759 = vrot.slane %v754, %v758
    %v777 = vunpack.c.l.b16 %v738
    %v778 = vunpack.c.l.b16 %v739
    %v779 = vunpack.c.l.b16 %v740
    %v780 = vunpack.c.l.b16 %v741
    %v781 = vunpack.c.l.b16 %v742
    %v782 = vunpack.c.l.b16 %v743
    %v783 = vunpack.c.l.b16 %v744
    %v784 = vunpack.c.l.b16 %v745
    %v785 = vunpack.c.l.b16 %v746
    %v786 = vunpack.c.l.b16 %v747
    %v787 = vunpack.c.l.b16 %v748
    %v788 = vunpack.c.l.b16 %v749
    %v789 = vunpack.c.l.b16 %v750
    %v790 = vunpack.c.l.b16 %v751
    %v791 = vunpack.c.l.b16 %v752
    %v792 = vunpack.c.l.b16 %v753
    %v793 = vpack.c.b16 %v778, %v777
    %v794 = vpack.c.b16 %v780, %v779
    %v795 = vpack.c.b16 %v782, %v781
    %v796 = vpack.c.b16 %v784, %v783
    %v797 = vpack.c.b16 %v786, %v785
    %v798 = vpack.c.b16 %v788, %v787
    %v799 = vpack.c.b16 %v790, %v789
    %v800 = vpack.c.b16 %v792, %v791
    %809 = vmatprep.subr.bf16.mxu0 0
    %810 = vmatpush1.bf16.msra.mxu0 %v800
    %811 = vmatprep.subr.bf16.mxu0 0
    %812 = vmatpush1.bf16.msra.mxu0 %v799
    %813 = vmatprep.subr.bf16.mxu0 0
    %814 = vmatpush1.bf16.msra.mxu0 %v798
    %815 = vmatprep.subr.bf16.mxu0 0
    %816 = vmatpush1.bf16.msra.mxu0 %v797
    %817 = vmatprep.subr.bf16.mxu0 0
    %818 = vmatpush1.bf16.msra.mxu0 %v796
    %819 = vmatprep.subr.bf16.mxu0 0
    %820 = vmatpush1.bf16.msra.mxu0 %v795
    %821 = vmatprep.subr.bf16.mxu0 0
    %822 = vmatpush1.bf16.msra.mxu0 %v794
    %823 = vmatprep.subr.bf16.mxu0 0
    %824 = vmatpush1.bf16.msra.mxu0 %v793
    %825 = vmatprep.subr.bf16.mxu0 0
    %826 = vmatpush2.bf16.msra.mxu0 0
    %827 = vmatprep.subr.bf16.mxu0 0
    %828 = vmatpush2.bf16.msra.mxu0 0
    %829 = vmatprep.subr.bf16.mxu0 0
    %830 = vmatpush2.bf16.msra.mxu0 0
    %831 = vmatprep.subr.bf16.mxu0 0
    %832 = vmatpush2.bf16.msra.mxu0 0
    %833 = vmatprep.subr.bf16.mxu0 0
    %834 = vmatpush2.bf16.msra.mxu0 0
    %835 = vmatprep.subr.bf16.mxu0 0
    %836 = vmatpush2.bf16.msra.mxu0 0
    %837 = vmatprep.subr.bf16.mxu0 0
    %838 = vmatpush2.bf16.msra.mxu0 0
    %839 = vmatprep.subr.bf16.mxu0 0
    %840 = vmatpush2.bf16.msra.mxu0 0
    %841 = vmatprep.mubr.bf16.mxu0 0
    %842 = vmatmul.mubr.bf16.gmra.mxu0 %v737
    %v843 = vpop.f32.mrf.mxu0
    %v844 = vadd.f32 %v759, %v843
    %v845 = vpop.f32.mrf.mxu0
    %v846 = vpop.f32.mrf.mxu0
    %v847 = vpop.f32.mrf.mxu0
    %848 = vdwg.mxu0
    %v849 = vmax.f32 %v844, 0.0
    %v850 = vpack.c.bf16 %v849, %v849
    %v851 = vld [vmem:[%s5] sm:$0xff]
    %v852 = vld [vmem:[%s5 + $0x8] sm:$0xff]
    %v853 = vld [vmem:[%s5 + $0x10] sm:$0xff]
    %v854 = vld [vmem:[%s5 + $0x18] sm:$0xff]
    %v855 = vld [vmem:[%s5 + $0x20] sm:$0xff]
    %v856 = vld [vmem:[%s5 + $0x28] sm:$0xff]
    %v857 = vld [vmem:[%s5 + $0x30] sm:$0xff]
    %v858 = vld [vmem:[%s5 + $0x38] sm:$0xff]
    %v859 = vld [vmem:[%s5 + $0x40] sm:$0xff]
    %v860 = vld [vmem:[%s5 + $0x48] sm:$0xff]
    %v861 = vld [vmem:[%s5 + $0x50] sm:$0xff]
    %v862 = vld [vmem:[%s5 + $0x58] sm:$0xff]
    %v863 = vld [vmem:[%s5 + $0x60] sm:$0xff]
    %v864 = vld [vmem:[%s5 + $0x68] sm:$0xff]
    %v865 = vld [vmem:[%s5 + $0x70] sm:$0xff]
    %v866 = vld [vmem:[%s5 + $0x78] sm:$0xff]
    %v867 = vld [vmem:[%s6] sm:$0x3]
    %v869 = vlaneseq
    %v870 = vshrl.u32 %v869, 7
    %v871 = vsub.s32 0, %v870
    %v872 = vrot.slane %v867, %v871
    %v873 = vlaneseq
    %v874 = vshrl.u32 %v873, 7
    %v875 = vsub.s32 1, %v874
    %v876 = vrot.slane %v867, %v875
    %v895 = vunpack.c.l.b16 %v851
    %v896 = vunpack.c.h.b16 %v851
    %v897 = vunpack.c.l.b16 %v852
    %v898 = vunpack.c.h.b16 %v852
    %v899 = vunpack.c.l.b16 %v853
    %v900 = vunpack.c.h.b16 %v853
    %v901 = vunpack.c.l.b16 %v854
    %v902 = vunpack.c.h.b16 %v854
    %v903 = vunpack.c.l.b16 %v855
    %v904 = vunpack.c.h.b16 %v855
    %v905 = vunpack.c.l.b16 %v856
    %v906 = vunpack.c.h.b16 %v856
    %v907 = vunpack.c.l.b16 %v857
    %v908 = vunpack.c.h.b16 %v857
    %v909 = vunpack.c.l.b16 %v858
    %v910 = vunpack.c.h.b16 %v858
    %v911 = vunpack.c.l.b16 %v859
    %v912 = vunpack.c.h.b16 %v859
    %v913 = vunpack.c.l.b16 %v860
    %v914 = vunpack.c.h.b16 %v860
    %v915 = vunpack.c.l.b16 %v861
    %v916 = vunpack.c.h.b16 %v861
    %v917 = vunpack.c.l.b16 %v862
    %v918 = vunpack.c.h.b16 %v862
    %v919 = vunpack.c.l.b16 %v863
    %v920 = vunpack.c.h.b16 %v863
    %v921 = vunpack.c.l.b16 %v864
    %v922 = vunpack.c.h.b16 %v864
    %v923 = vunpack.c.l.b16 %v865
    %v924 = vunpack.c.h.b16 %v865
    %v925 = vunpack.c.l.b16 %v866
    %v926 = vunpack.c.h.b16 %v866
    %v927 = vpack.c.b16 %v897, %v895
    %v928 = vpack.c.b16 %v898, %v896
    %v929 = vpack.c.b16 %v901, %v899
    %v930 = vpack.c.b16 %v902, %v900
    %v931 = vpack.c.b16 %v905, %v903
    %v932 = vpack.c.b16 %v906, %v904
    %v933 = vpack.c.b16 %v909, %v907
    %v934 = vpack.c.b16 %v910, %v908
    %v935 = vpack.c.b16 %v913, %v911
    %v936 = vpack.c.b16 %v914, %v912
    %v937 = vpack.c.b16 %v917, %v915
    %v938 = vpack.c.b16 %v918, %v916
    %v939 = vpack.c.b16 %v921, %v919
    %v940 = vpack.c.b16 %v922, %v920
    %v941 = vpack.c.b16 %v925, %v923
    %v942 = vpack.c.b16 %v926, %v924
    %959 = vmatprep.subr.bf16.mxu0 %v942
    %960 = vmatpush1.bf16.msra.mxu0 %v941
    %961 = vmatprep.subr.bf16.mxu0 %v940
    %962 = vmatpush1.bf16.msra.mxu0 %v939
    %963 = vmatprep.subr.bf16.mxu0 %v938
    %964 = vmatpush1.bf16.msra.mxu0 %v937
    %965 = vmatprep.subr.bf16.mxu0 %v936
    %966 = vmatpush1.bf16.msra.mxu0 %v935
    %967 = vmatprep.subr.bf16.mxu0 %v934
    %968 = vmatpush1.bf16.msra.mxu0 %v933
    %969 = vmatprep.subr.bf16.mxu0 %v932
    %970 = vmatpush1.bf16.msra.mxu0 %v931
    %971 = vmatprep.subr.bf16.mxu0 %v930
    %972 = vmatpush1.bf16.msra.mxu0 %v929
    %973 = vmatprep.subr.bf16.mxu0 %v928
    %974 = vmatpush1.bf16.msra.mxu0 %v927
    %975 = vmatprep.subr.bf16.mxu0 0
    %976 = vmatpush2.bf16.msra.mxu0 0
    %977 = vmatprep.subr.bf16.mxu0 0
    %978 = vmatpush2.bf16.msra.mxu0 0
    %979 = vmatprep.subr.bf16.mxu0 0
    %980 = vmatpush2.bf16.msra.mxu0 0
    %981 = vmatprep.subr.bf16.mxu0 0
    %982 = vmatpush2.bf16.msra.mxu0 0
    %983 = vmatprep.subr.bf16.mxu0 0
    %984 = vmatpush2.bf16.msra.mxu0 0
    %985 = vmatprep.subr.bf16.mxu0 0
    %986 = vmatpush2.bf16.msra.mxu0 0
    %987 = vmatprep.subr.bf16.mxu0 0
    %988 = vmatpush2.bf16.msra.mxu0 0
    %989 = vmatprep.subr.bf16.mxu0 0
    %990 = vmatpush2.bf16.msra.mxu0 0
    %991 = vmatprep.mubr.bf16.mxu0 0
    %992 = vmatmul.mubr.bf16.gmra.mxu0 %v850
    %v993 = vpop.f32.mrf.mxu0
    %v994 = vadd.f32 %v872, %v993
    %v995 = vpop.f32.mrf.mxu0
    %v996 = vadd.f32 %v876, %v995
    %v997 = vpop.f32.mrf.mxu0
    %v998 = vpop.f32.mrf.mxu0
    %999 = vdwg.mxu0
    %1000 = vst [vmem:[%s7] sm:$0xff] %v994
    %1001 = vst [vmem:[%s7 + $0x8] sm:$0xff] %v996
    // Predicated region
    $region34: #{fast_net_forward.1} parent=1 // pred_check
      _
    $region35: #{fast_net_forward.1} parent=1 // pred_check_branch
      %1003 = sbr.rel (0) target = $region37
    $region36: #{fast_net_forward.1} parent=1 // pred_region
      _
    $region37: #{fast_net_forward.1} parent=1 // pred_fallthru
      _
    // Predicated region
    $region38: #{fast_net_forward.1} parent=1 // pred_check
      _
    $region39: #{fast_net_forward.1} parent=1 // pred_check_branch
      %1005 = sbr.rel (0) target = $region41
    $region40: #{fast_net_forward.1} parent=1 // pred_region
      _
    $region41: #{fast_net_forward.1} parent=1 // pred_fallthru
      _
    %1006 = vsyncpa [#allocation3], 1

// kernel: fast_net_forward.1
$region0: #{fast_net_forward.1}
  #allocation0 [shape = 'u32[]', space=smem, size = 0x4, offset = 0x4, fixed_abs, tag = 'smem constant byte address 0x4 - core index']
  #allocation1 [shape = 'u32[144,128]{1,0:T(1,128)}', space=vmem, size = 0x12000, scoped, tag = 'internal scratch']
  %s0 = inlined_call_operand.vmem [shape: f32[8,1024], index: 0, kind: input, shape index: {}]
  %s1 = inlined_call_operand.hbm [shape: bf16[1024,128], index: 1, kind: input, shape index: {}]
  %s2 = inlined_call_operand.vmem [shape: f32[1,128], index: 2, kind: input, shape index: {}]
  %s3 = inlined_call_operand.vmem [shape: bf16[128,128], index: 3, kind: input, shape index: {}]
  %s4 = inlined_call_operand.vmem [shape: f32[1,128], index: 4, kind: input, shape index: {}]
  %s5 = inlined_call_operand.vmem [shape: bf16[128,256], index: 5, kind: input, shape index: {}]
  %s6 = inlined_call_operand.vmem [shape: f32[1,256], index: 6, kind: input, shape index: {}]
  %s7 = inlined_call_operand.vmem [shape: f32[8,256], index: 7, kind: output, shape index: {}]
  %s8 = sld [smem:[#allocation0]]
  $region42: #{fast_net_forward.1} parent=0
    _
  %s10 = ssub.s32 1, %s8
  %s11 = scalar_select 0, %s10, %s8
  $region1: #{fast_net_forward.1} parent=0
    #allocation2 [shape = 'u8[262144]{0}', space=vmem, size = 0x40000, scoped, tag = 'input window, operand 1, single buffered']
    #allocation3 [shape = 's32[1]{0}', space=sflag, size = 0x4, scoped, tag = 'scoped memory for fast_net_forward.1']
    %12 = vsyncpa [#allocation3], 0
    // Predicated region
    $region2: #{fast_net_forward.1} parent=1 // pred_check
      _
    $region3: #{fast_net_forward.1} parent=1 // pred_check_branch
      %14 = sbr.rel (0) target = $region5
    $region4: #{fast_net_forward.1} parent=1 // pred_region
      _
    $region5: #{fast_net_forward.1} parent=1 // pred_fallthru
      _
    // Predicated region
    $region6: #{fast_net_forward.1} parent=1 // pred_check
      _
    $region7: #{fast_net_forward.1} parent=1 // pred_check_branch
      %16 = sbr.rel (0) target = $region9
    $region8: #{fast_net_forward.1} parent=1 // pred_region
      %s18 = ssub.s32 8192, 8192
      %19 = vsyncadd [#allocation3], %s18
      %s20 = sshll.u32 [#allocation2], 4
      %s21 = int_to_ptr.vmem [resolvable:$true] %s20
      %26 = dma.hbm_to_vmem [thread:$0]  %s1, 8192, %s21, [#allocation3], 64, 64, 4
    $region9: #{fast_net_forward.1} parent=1 // pred_fallthru
      _
    // Predicated region
    $region10: #{fast_net_forward.1} parent=1 // pred_check
      _
    $region11: #{fast_net_forward.1} parent=1 // pred_check_branch
      %28 = sbr.rel (0) target = $region13
    $region12: #{fast_net_forward.1} parent=1 // pred_region
      _
    $region13: #{fast_net_forward.1} parent=1 // pred_fallthru
      _
    // Predicated region
    $region14: #{fast_net_forward.1} parent=1 // pred_check
      _
    $region15: #{fast_net_forward.1} parent=1 // pred_check_branch
      %30 = sbr.rel (0) target = $region17
    $region16: #{fast_net_forward.1} parent=1 // pred_region
      _
    $region17: #{fast_net_forward.1} parent=1 // pred_fallthru
      _
    // Predicated region
    $region18: #{fast_net_forward.1} parent=1 // pred_check
      _
    $region19: #{fast_net_forward.1} parent=1 // pred_check_branch
      %32 = sbr.rel (0) target = $region21
    $region20: #{fast_net_forward.1} parent=1 // pred_region
      _
    $region21: #{fast_net_forward.1} parent=1 // pred_fallthru
      _
    // Predicated region
    $region22: #{fast_net_forward.1} parent=1 // pred_check
      _
    $region23: #{fast_net_forward.1} parent=1 // pred_check_branch
      %34 = sbr.rel (0) target = $region25
    $region24: #{fast_net_forward.1} parent=1 // pred_region
      _
    $region25: #{fast_net_forward.1} parent=1 // pred_fallthru
      _
    // Predicated region
    $region26: #{fast_net_forward.1} parent=1 // pred_check
      _
    $region27: #{fast_net_forward.1} parent=1 // pred_check_branch
      %36 = sbr.rel (0) target = $region29
    $region28: #{fast_net_forward.1} parent=1 // pred_region
      _
    $region29: #{fast_net_forward.1} parent=1 // pred_fallthru
      _
    // Predicated region
    $region30: #{fast_net_forward.1} parent=1 // pred_check
      _
    $region31: #{fast_net_forward.1} parent=1 // pred_check_branch
      %38 = sbr.rel (0) target = $region33
    $region32: #{fast_net_forward.1} parent=1 // pred_region
      %39 = dma.done [#allocation3], 8192
    $region33: #{fast_net_forward.1} parent=1 // pred_fallthru
      _
    %v41 = vld [vmem:[%s0] sm:$0xff]
    %v42 = vld [vmem:[%s0 + $0x8] sm:$0xff]
    %v43 = vld [vmem:[%s0 + $0x10] sm:$0xff]
    %v44 = vld [vmem:[%s0 + $0x18] sm:$0xff]
    %v45 = vld [vmem:[%s0 + $0x20] sm:$0xff]
    %v46 = vld [vmem:[%s0 + $0x28] sm:$0xff]
    %v47 = vld [vmem:[%s0 + $0x30] sm:$0xff]
    %v48 = vld [vmem:[%s0 + $0x38] sm:$0xff]
    %v49 = vpack.c.bf16 %v41, %v41
    %v50 = vpack.c.bf16 %v42, %v42
    %v51 = vpack.c.bf16 %v43, %v43
    %v52 = vpack.c.bf16 %v44, %v44
    %v53 = vpack.c.bf16 %v45, %v45
    %v54 = vpack.c.bf16 %v46, %v46
    %v55 = vpack.c.bf16 %v47, %v47
    %v56 = vpack.c.bf16 %v48, %v48
    %v57 = vld [vmem:[#allocation2] sm:$0xf]
    %v58 = vld [vmem:[#allocation2 + $0x4] sm:$0xf]
    %v59 = vld [vmem:[#allocation2 + $0x8] sm:$0xf]
    %v60 = vld [vmem:[#allocation2 + $0xc] sm:$0xf]
    %v61 = vld [vmem:[#allocation2 + $0x10] sm:$0xf]
    %v62 = vld [vmem:[#allocation2 + $0x14] sm:$0xf]
    %v63 = vld [vmem:[#allocation2 + $0x18] sm:$0xf]
    %v64 = vld [vmem:[#allocation2 + $0x1c] sm:$0xf]
    %v65 = vld [vmem:[#allocation2 + $0x20] sm:$0xf]
    %v66 = vld [vmem:[#allocation2 + $0x24] sm:$0xf]
    %v67 = vld [vmem:[#allocation2 + $0x28] sm:$0xf]
    %v68 = vld [vmem:[#allocation2 + $0x2c] sm:$0xf]
    %v69 = vld [vmem:[#allocation2 + $0x30] sm:$0xf]
    %v70 = vld [vmem:[#allocation2 + $0x34] sm:$0xf]
    %v71 = vld [vmem:[#allocation2 + $0x38] sm:$0xf]
    %v72 = vld [vmem:[#allocation2 + $0x3c] sm:$0xf]
    %v73 = vld [vmem:[#allocation2 + $0x40] sm:$0xf]
    %v74 = vld [vmem:[#allocation2 + $0x44] sm:$0xf]
    %v75 = vld [vmem:[#allocation2 + $0x48] sm:$0xf]
    %v76 = vld [vmem:[#allocation2 + $0x4c] sm:$0xf]
    %v77 = vld [vmem:[#allocation2 + $0x50] sm:$0xf]
    %v78 = vld [vmem:[#allocation2 + $0x54] sm:$0xf]
    %v79 = vld [vmem:[#allocation2 + $0x58] sm:$0xf]
    %v80 = vld [vmem:[#allocation2 + $0x5c] sm:$0xf]
    %v81 = vld [vmem:[#allocation2 + $0x60] sm:$0xf]
    %v82 = vld [vmem:[#allocation2 + $0x64] sm:$0xf]
    %v83 = vld [vmem:[#allocation2 + $0x68] sm:$0xf]
    %v84 = vld [vmem:[#allocation2 + $0x6c] sm:$0xf]
    %v85 = vld [vmem:[#allocation2 + $0x70] sm:$0xf]
    %v86 = vld [vmem:[#allocation2 + $0x74] sm:$0xf]
    %v87 = vld [vmem:[#allocation2 + $0x78] sm:$0xf]
    %v88 = vld [vmem:[#allocation2 + $0x7c] sm:$0xf]
    %v89 = vld [vmem:[#allocation2 + $0x80] sm:$0xf]
    %v90 = vld [vmem:[#allocation2 + $0x84] sm:$0xf]
    %v91 = vld [vmem:[#allocation2 + $0x88] sm:$0xf]
    %v92 = vld [vmem:[#allocation2 + $0x8c] sm:$0xf]
    %v93 = vld [vmem:[#allocation2 + $0x90] sm:$0xf]
    %v94 = vld [vmem:[#allocation2 + $0x94] sm:$0xf]
    %v95 = vld [vmem:[#allocation2 + $0x98] sm:$0xf]
    %v96 = vld [vmem:[#allocation2 + $0x9c] sm:$0xf]
    %v97 = vld [vmem:[#allocation2 + $0xa0] sm:$0xf]
    %v98 = vld [vmem:[#allocation2 + $0xa4] sm:$0xf]
    %v99 = vld [vmem:[#allocation2 + $0xa8] sm:$0xf]
    %v100 = vld [vmem:[#allocation2 + $0xac] sm:$0xf]
    %v101 = vld [vmem:[#allocation2 + $0xb0] sm:$0xf]
    %v102 = vld [vmem:[#allocation2 + $0xb4] sm:$0xf]
    %v103 = vld [vmem:[#allocation2 + $0xb8] sm:$0xf]
    %v104 = vld [vmem:[#allocation2 + $0xbc] sm:$0xf]
    %v105 = vld [vmem:[#allocation2 + $0xc0] sm:$0xf]
    %v106 = vld [vmem:[#allocation2 + $0xc4] sm:$0xf]
    %v107 = vld [vmem:[#allocation2 + $0xc8] sm:$0xf]
    %v108 = vld [vmem:[#allocation2 + $0xcc] sm:$0xf]
    %v109 = vld [vmem:[#allocation2 + $0xd0] sm:$0xf]
    %v110 = vld [vmem:[#allocation2 + $0xd4] sm:$0xf]
    %v111 = vld [vmem:[#allocation2 + $0xd8] sm:$0xf]
    %v112 = vld [vmem:[#allocation2 + $0xdc] sm:$0xf]
    %v113 = vld [vmem:[#allocation2 + $0xe0] sm:$0xf]
    %v114 = vld [vmem:[#allocation2 + $0xe4] sm:$0xf]
    %v115 = vld [vmem:[#allocation2 + $0xe8] sm:$0xf]
    %v116 = vld [vmem:[#allocation2 + $0xec] sm:$0xf]
    %v117 = vld [vmem:[#allocation2 + $0xf0] sm:$0xf]
    %v118 = vld [vmem:[#allocation2 + $0xf4] sm:$0xf]
    %v119 = vld [vmem:[#allocation2 + $0xf8] sm:$0xf]
    %v120 = vld [vmem:[#allocation2 + $0xfc] sm:$0xf]
    %v121 = vld [vmem:[#allocation2 + $0x100] sm:$0xf]
    %v122 = vld [vmem:[#allocation2 + $0x104] sm:$0xf]
    %v123 = vld [vmem:[#allocation2 + $0x108] sm:$0xf]
    %v124 = vld [vmem:[#allocation2 + $0x10c] sm:$0xf]
    %v125 = vld [vmem:[#allocation2 + $0x110] sm:$0xf]
    %v126 = vld [vmem:[#allocation2 + $0x114] sm:$0xf]
    %v127 = vld [vmem:[#allocation2 + $0x118] sm:$0xf]
    %v128 = vld [vmem:[#allocation2 + $0x11c] sm:$0xf]
    %v129 = vld [vmem:[#allocation2 + $0x120] sm:$0xf]
    %v130 = vld [vmem:[#allocation2 + $0x124] sm:$0xf]
    %v131 = vld [vmem:[#allocation2 + $0x128] sm:$0xf]
    %v132 = vld [vmem:[#allocation2 + $0x12c] sm:$0xf]
    %v133 = vld [vmem:[#allocation2 + $0x130] sm:$0xf]
    %v134 = vld [vmem:[#allocation2 + $0x134] sm:$0xf]
    %v135 = vld [vmem:[#allocation2 + $0x138] sm:$0xf]
    %v136 = vld [vmem:[#allocation2 + $0x13c] sm:$0xf]
    %v137 = vld [vmem:[#allocation2 + $0x140] sm:$0xf]
    %v138 = vld [vmem:[#allocation2 + $0x144] sm:$0xf]
    %v139 = vld [vmem:[#allocation2 + $0x148] sm:$0xf]
    %v140 = vld [vmem:[#allocation2 + $0x14c] sm:$0xf]
    %v141 = vld [vmem:[#allocation2 + $0x150] sm:$0xf]
    %v142 = vld [vmem:[#allocation2 + $0x154] sm:$0xf]
    %v143 = vld [vmem:[#allocation2 + $0x158] sm:$0xf]
    %v144 = vld [vmem:[#allocation2 + $0x15c] sm:$0xf]
    %v145 = vld [vmem:[#allocation2 + $0x160] sm:$0xf]
    %v146 = vld [vmem:[#allocation2 + $0x164] sm:$0xf]
    %v147 = vld [vmem:[#allocation2 + $0x168] sm:$0xf]
    %v148 = vld [vmem:[#allocation2 + $0x16c] sm:$0xf]
    %v149 = vld [vmem:[#allocation2 + $0x170] sm:$0xf]
    %v150 = vld [vmem:[#allocation2 + $0x174] sm:$0xf]
    %v151 = vld [vmem:[#allocation2 + $0x178] sm:$0xf]
    %v152 = vld [vmem:[#allocation2 + $0x17c] sm:$0xf]
    %v153 = vld [vmem:[#allocation2 + $0x180] sm:$0xf]
    %v154 = vld [vmem:[#allocation2 + $0x184] sm:$0xf]
    %v155 = vld [vmem:[#allocation2 + $0x188] sm:$0xf]
    %v156 = vld [vmem:[#allocation2 + $0x18c] sm:$0xf]
    %v157 = vld [vmem:[#allocation2 + $0x190] sm:$0xf]
    %v158 = vld [vmem:[#allocation2 + $0x194] sm:$0xf]
    %v159 = vld [vmem:[#allocation2 + $0x198] sm:$0xf]
    %v160 = vld [vmem:[#allocation2 + $0x19c] sm:$0xf]
    %v161 = vld [vmem:[#allocation2 + $0x1a0] sm:$0xf]
    %v162 = vld [vmem:[#allocation2 + $0x1a4] sm:$0xf]
    %v163 = vld [vmem:[#allocation2 + $0x1a8] sm:$0xf]
    %v164 = vld [vmem:[#allocation2 + $0x1ac] sm:$0xf]
    %v165 = vld [vmem:[#allocation2 + $0x1b0] sm:$0xf]
    %v166 = vld [vmem:[#allocation2 + $0x1b4] sm:$0xf]
    %v167 = vld [vmem:[#allocation2 + $0x1b8] sm:$0xf]
    %v168 = vld [vmem:[#allocation2 + $0x1bc] sm:$0xf]
    %v169 = vld [vmem:[#allocation2 + $0x1c0] sm:$0xf]
    %v170 = vld [vmem:[#allocation2 + $0x1c4] sm:$0xf]
    %v171 = vld [vmem:[#allocation2 + $0x1c8] sm:$0xf]
    %v172 = vld [vmem:[#allocation2 + $0x1cc] sm:$0xf]
    %v173 = vld [vmem:[#allocation2 + $0x1d0] sm:$0xf]
    %v174 = vld [vmem:[#allocation2 + $0x1d4] sm:$0xf]
    %v175 = vld [vmem:[#allocation2 + $0x1d8] sm:$0xf]
    %v176 = vld [vmem:[#allocation2 + $0x1dc] sm:$0xf]
    %v177 = vld [vmem:[#allocation2 + $0x1e0] sm:$0xf]
    %v178 = vld [vmem:[#allocation2 + $0x1e4] sm:$0xf]
    %v179 = vld [vmem:[#allocation2 + $0x1e8] sm:$0xf]
    %v180 = vld [vmem:[#allocation2 + $0x1ec] sm:$0xf]
    %v181 = vld [vmem:[#allocation2 + $0x1f0] sm:$0xf]
    %v182 = vld [vmem:[#allocation2 + $0x1f4] sm:$0xf]
    %v183 = vld [vmem:[#allocation2 + $0x1f8] sm:$0xf]
    %v184 = vld [vmem:[#allocation2 + $0x1fc] sm:$0xf]
    %v185 = vld [vmem:[%s2] sm:$0x1]
    %v187 = vlaneseq
    %v188 = vshrl.u32 %v187, 7
    %v189 = vsub.s32 0, %v188
    %v190 = vrot.slane %v185, %v189
    %v320 = vunpack.c.l.b16 %v57
    %v321 = vunpack.c.l.b16 %v58
    %v322 = vunpack.c.l.b16 %v59
    %v323 = vunpack.c.l.b16 %v60
    %v324 = vunpack.c.l.b16 %v61
    %v325 = vunpack.c.l.b16 %v62
    %v326 = vunpack.c.l.b16 %v63
    %v327 = vunpack.c.l.b16 %v64
    %v328 = vunpack.c.l.b16 %v65
    %v329 = vunpack.c.l.b16 %v66
    %v330 = vunpack.c.l.b16 %v67
    %v331 = vunpack.c.l.b16 %v68
    %v332 = vunpack.c.l.b16 %v69
    %v333 = vunpack.c.l.b16 %v70
    %v334 = vunpack.c.l.b16 %v71
    %v335 = vunpack.c.l.b16 %v72
    %v336 = vunpack.c.l.b16 %v73
    %v337 = vunpack.c.l.b16 %v74
    %v338 = vunpack.c.l.b16 %v75
    %v339 = vunpack.c.l.b16 %v76
    %v340 = vunpack.c.l.b16 %v77
    %v341 = vunpack.c.l.b16 %v78
    %v342 = vunpack.c.l.b16 %v79
    %v343 = vunpack.c.l.b16 %v80
    %v344 = vunpack.c.l.b16 %v81
    %v345 = vunpack.c.l.b16 %v82
    %v346 = vunpack.c.l.b16 %v83
    %v347 = vunpack.c.l.b16 %v84
    %v348 = vunpack.c.l.b16 %v85
    %v349 = vunpack.c.l.b16 %v86
    %v350 = vunpack.c.l.b16 %v87
    %v351 = vunpack.c.l.b16 %v88
    %v352 = vunpack.c.l.b16 %v89
    %v353 = vunpack.c.l.b16 %v90
    %v354 = vunpack.c.l.b16 %v91
    %v355 = vunpack.c.l.b16 %v92
    %v356 = vunpack.c.l.b16 %v93
    %v357 = vunpack.c.l.b16 %v94
    %v358 = vunpack.c.l.b16 %v95
    %v359 = vunpack.c.l.b16 %v96
    %v360 = vunpack.c.l.b16 %v97
    %v361 = vunpack.c.l.b16 %v98
    %v362 = vunpack.c.l.b16 %v99
    %v363 = vunpack.c.l.b16 %v100
    %v364 = vunpack.c.l.b16 %v101
    %v365 = vunpack.c.l.b16 %v102
    %v366 = vunpack.c.l.b16 %v103
    %v367 = vunpack.c.l.b16 %v104
    %v368 = vunpack.c.l.b16 %v105
    %v369 = vunpack.c.l.b16 %v106
    %v370 = vunpack.c.l.b16 %v107
    %v371 = vunpack.c.l.b16 %v108
    %v372 = vunpack.c.l.b16 %v109
    %v373 = vunpack.c.l.b16 %v110
    %v374 = vunpack.c.l.b16 %v111
    %v375 = vunpack.c.l.b16 %v112
    %v376 = vunpack.c.l.b16 %v113
    %v377 = vunpack.c.l.b16 %v114
    %v378 = vunpack.c.l.b16 %v115
    %v379 = vunpack.c.l.b16 %v116
    %v380 = vunpack.c.l.b16 %v117
    %v381 = vunpack.c.l.b16 %v118
    %v382 = vunpack.c.l.b16 %v119
    %v383 = vunpack.c.l.b16 %v120
    %v384 = vunpack.c.l.b16 %v121
    %v385 = vunpack.c.l.b16 %v122
    %v386 = vunpack.c.l.b16 %v123
    %v387 = vunpack.c.l.b16 %v124
    %v388 = vunpack.c.l.b16 %v125
    %v389 = vunpack.c.l.b16 %v126
    %v390 = vunpack.c.l.b16 %v127
    %v391 = vunpack.c.l.b16 %v128
    %v392 = vunpack.c.l.b16 %v129
    %v393 = vunpack.c.l.b16 %v130
    %v394 = vunpack.c.l.b16 %v131
    %v395 = vunpack.c.l.b16 %v132
    %v396 = vunpack.c.l.b16 %v133
    %v397 = vunpack.c.l.b16 %v134
    %v398 = vunpack.c.l.b16 %v135
    %v399 = vunpack.c.l.b16 %v136
    %v400 = vunpack.c.l.b16 %v137
    %v401 = vunpack.c.l.b16 %v138
    %v402 = vunpack.c.l.b16 %v139
    %v403 = vunpack.c.l.b16 %v140
    %v404 = vunpack.c.l.b16 %v141
    %v405 = vunpack.c.l.b16 %v142
    %v406 = vunpack.c.l.b16 %v143
    %v407 = vunpack.c.l.b16 %v144
    %v408 = vunpack.c.l.b16 %v145
    %v409 = vunpack.c.l.b16 %v146
    %v410 = vunpack.c.l.b16 %v147
    %v411 = vunpack.c.l.b16 %v148
    %v412 = vunpack.c.l.b16 %v149
    %v413 = vunpack.c.l.b16 %v150
    %v414 = vunpack.c.l.b16 %v151
    %v415 = vunpack.c.l.b16 %v152
    %v416 = vunpack.c.l.b16 %v153
    %v417 = vunpack.c.l.b16 %v154
    %v418 = vunpack.c.l.b16 %v155
    %v419 = vunpack.c.l.b16 %v156
    %v420 = vunpack.c.l.b16 %v157
    %v421 = vunpack.c.l.b16 %v158
    %v422 = vunpack.c.l.b16 %v159
    %v423 = vunpack.c.l.b16 %v160
    %v424 = vunpack.c.l.b16 %v161
    %v425 = vunpack.c.l.b16 %v162
    %v426 = vunpack.c.l.b16 %v163
    %v427 = vunpack.c.l.b16 %v164
    %v428 = vunpack.c.l.b16 %v165
    %v429 = vunpack.c.l.b16 %v166
    %v430 = vunpack.c.l.b16 %v167
    %v431 = vunpack.c.l.b16 %v168
    %v432 = vunpack.c.l.b16 %v169
    %v433 = vunpack.c.l.b16 %v170
    %v434 = vunpack.c.l.b16 %v171
    %v435 = vunpack.c.l.b16 %v172
    %v436 = vunpack.c.l.b16 %v173
    %v437 = vunpack.c.l.b16 %v174
    %v438 = vunpack.c.l.b16 %v175
    %v439 = vunpack.c.l.b16 %v176
    %v440 = vunpack.c.l.b16 %v177
    %v441 = vunpack.c.l.b16 %v178
    %v442 = vunpack.c.l.b16 %v179
    %v443 = vunpack.c.l.b16 %v180
    %v444 = vunpack.c.l.b16 %v181
    %v445 = vunpack.c.l.b16 %v182
    %v446 = vunpack.c.l.b16 %v183
    %v447 = vunpack.c.l.b16 %v184
    %v448 = vpack.c.b16 %v321, %v320
    %v449 = vpack.c.b16 %v323, %v322
    %v450 = vpack.c.b16 %v325, %v324
    %v451 = vpack.c.b16 %v327, %v326
    %v452 = vpack.c.b16 %v329, %v328
    %v453 = vpack.c.b16 %v331, %v330
    %v454 = vpack.c.b16 %v333, %v332
    %v455 = vpack.c.b16 %v335, %v334
    %v456 = vpack.c.b16 %v337, %v336
    %v457 = vpack.c.b16 %v339, %v338
    %v458 = vpack.c.b16 %v341, %v340
    %v459 = vpack.c.b16 %v343, %v342
    %v460 = vpack.c.b16 %v345, %v344
    %v461 = vpack.c.b16 %v347, %v346
    %v462 = vpack.c.b16 %v349, %v348
    %v463 = vpack.c.b16 %v351, %v350
    %v464 = vpack.c.b16 %v353, %v352
    %v465 = vpack.c.b16 %v355, %v354
    %v466 = vpack.c.b16 %v357, %v356
    %v467 = vpack.c.b16 %v359, %v358
    %v468 = vpack.c.b16 %v361, %v360
    %v469 = vpack.c.b16 %v363, %v362
    %v470 = vpack.c.b16 %v365, %v364
    %v471 = vpack.c.b16 %v367, %v366
    %v472 = vpack.c.b16 %v369, %v368
    %v473 = vpack.c.b16 %v371, %v370
    %v474 = vpack.c.b16 %v373, %v372
    %v475 = vpack.c.b16 %v375, %v374
    %v476 = vpack.c.b16 %v377, %v376
    %v477 = vpack.c.b16 %v379, %v378
    %v478 = vpack.c.b16 %v381, %v380
    %v479 = vpack.c.b16 %v383, %v382
    %v480 = vpack.c.b16 %v385, %v384
    %v481 = vpack.c.b16 %v387, %v386
    %v482 = vpack.c.b16 %v389, %v388
    %v483 = vpack.c.b16 %v391, %v390
    %v484 = vpack.c.b16 %v393, %v392
    %v485 = vpack.c.b16 %v395, %v394
    %v486 = vpack.c.b16 %v397, %v396
    %v487 = vpack.c.b16 %v399, %v398
    %v488 = vpack.c.b16 %v401, %v400
    %v489 = vpack.c.b16 %v403, %v402
    %v490 = vpack.c.b16 %v405, %v404
    %v491 = vpack.c.b16 %v407, %v406
    %v492 = vpack.c.b16 %v409, %v408
    %v493 = vpack.c.b16 %v411, %v410
    %v494 = vpack.c.b16 %v413, %v412
    %v495 = vpack.c.b16 %v415, %v414
    %v496 = vpack.c.b16 %v417, %v416
    %v497 = vpack.c.b16 %v419, %v418
    %v498 = vpack.c.b16 %v421, %v420
    %v499 = vpack.c.b16 %v423, %v422
    %v500 = vpack.c.b16 %v425, %v424
    %v501 = vpack.c.b16 %v427, %v426
    %v502 = vpack.c.b16 %v429, %v428
    %v503 = vpack.c.b16 %v431, %v430
    %v504 = vpack.c.b16 %v433, %v432
    %v505 = vpack.c.b16 %v435, %v434
    %v506 = vpack.c.b16 %v437, %v436
    %v507 = vpack.c.b16 %v439, %v438
    %v508 = vpack.c.b16 %v441, %v440
    %v509 = vpack.c.b16 %v443, %v442
    %v510 = vpack.c.b16 %v445, %v444
    %v511 = vpack.c.b16 %v447, %v446
    %576 = vmatprep.subr.bf16.mxu0 0
    %577 = vmatpush1.bf16.msra.mxu0 %v455
    %578 = vmatprep.subr.bf16.mxu0 0
    %579 = vmatpush1.bf16.msra.mxu0 %v454
    %580 = vmatprep.subr.bf16.mxu0 0
    %581 = vmatpush1.bf16.msra.mxu0 %v453
    %582 = vmatprep.subr.bf16.mxu0 0
    %583 = vmatpush1.bf16.msra.mxu0 %v452
    %584 = vmatprep.subr.bf16.mxu0 0
    %585 = vmatpush1.bf16.msra.mxu0 %v451
    %586 = vmatprep.subr.bf16.mxu0 0
    %587 = vmatpush1.bf16.msra.mxu0 %v450
    %588 = vmatprep.subr.bf16.mxu0 0
    %589 = vmatpush1.bf16.msra.mxu0 %v449
    %590 = vmatprep.subr.bf16.mxu0 0
    %591 = vmatpush1.bf16.msra.mxu0 %v448
    %592 = vmatprep.subr.bf16.mxu0 0
    %593 = vmatpush2.bf16.msra.mxu0 %v463
    %594 = vmatprep.subr.bf16.mxu0 0
    %595 = vmatpush2.bf16.msra.mxu0 %v462
    %596 = vmatprep.subr.bf16.mxu0 0
    %597 = vmatpush2.bf16.msra.mxu0 %v461
    %598 = vmatprep.subr.bf16.mxu0 0
    %599 = vmatpush2.bf16.msra.mxu0 %v460
    %600 = vmatprep.subr.bf16.mxu0 0
    %601 = vmatpush2.bf16.msra.mxu0 %v459
    %602 = vmatprep.subr.bf16.mxu0 0
    %603 = vmatpush2.bf16.msra.mxu0 %v458
    %604 = vmatprep.subr.bf16.mxu0 0
    %605 = vmatpush2.bf16.msra.mxu0 %v457
    %606 = vmatprep.subr.bf16.mxu0 0
    %607 = vmatpush2.bf16.msra.mxu0 %v456
    %608 = vmatprep.mubr.bf16.mxu0 %v50
    %609 = vmatmul.mubr.bf16.gmra.mxu0 %v49
    %v610 = vpop.f32.mrf.mxu0
    %v611 = vadd.f32 %v190, %v610
    %v612 = vpop.f32.mrf.mxu0
    %v613 = vpop.f32.mrf.mxu0
    %v614 = vpop.f32.mrf.mxu0
    %615 = vdwg.mxu0
    %616 = vmatprep.subr.bf16.mxu0 0
    %617 = vmatpush1.bf16.msra.mxu0 %v471
    %618 = vmatprep.subr.bf16.mxu0 0
    %619 = vmatpush1.bf16.msra.mxu0 %v470
    %620 = vmatprep.subr.bf16.mxu0 0
    %621 = vmatpush1.bf16.msra.mxu0 %v469
    %622 = vmatprep.subr.bf16.mxu0 0
    %623 = vmatpush1.bf16.msra.mxu0 %v468
    %624 = vmatprep.subr.bf16.mxu0 0
    %625 = vmatpush1.bf16.msra.mxu0 %v467
    %626 = vmatprep.subr.bf16.mxu0 0
    %627 = vmatpush1.bf16.msra.mxu0 %v466
    %628 = vmatprep.subr.bf16.mxu0 0
    %629 = vmatpush1.bf16.msra.mxu0 %v465
    %630 = vmatprep.subr.bf16.mxu0 0
    %631 = vmatpush1.bf16.msra.mxu0 %v464
    %632 = vmatprep.subr.bf16.mxu0 0
    %633 = vmatpush2.bf16.msra.mxu0 %v479
    %634 = vmatprep.subr.bf16.mxu0 0
    %635 = vmatpush2.bf16.msra.mxu0 %v478
    %636 = vmatprep.subr.bf16.mxu0 0
    %637 = vmatpush2.bf16.msra.mxu0 %v477
    %638 = vmatprep.subr.bf16.mxu0 0
    %639 = vmatpush2.bf16.msra.mxu0 %v476
    %640 = vmatprep.subr.bf16.mxu0 0
    %641 = vmatpush2.bf16.msra.mxu0 %v475
    %642 = vmatprep.subr.bf16.mxu0 0
    %643 = vmatpush2.bf16.msra.mxu0 %v474
    %644 = vmatprep.subr.bf16.mxu0 0
    %645 = vmatpush2.bf16.msra.mxu0 %v473
    %646 = vmatprep.subr.bf16.mxu0 0
    %647 = vmatpush2.bf16.msra.mxu0 %v472
    %648 = vmatprep.mubr.bf16.mxu0 %v52
    %649 = vmatmul.mubr.bf16.gmra.mxu0 %v51
    %v650 = vpop.f32.mrf.mxu0
    %v651 = vadd.f32 %v611, %v650
    %v652 = vpop.f32.mrf.mxu0
    %v653 = vpop.f32.mrf.mxu0
    %v654 = vpop.f32.mrf.mxu0
    %655 = vdwg.mxu0
    %656 = vmatprep.subr.bf16.mxu0 0
    %657 = vmatpush1.bf16.msra.mxu0 %v487
    %658 = vmatprep.subr.bf16.mxu0 0
    %659 = vmatpush1.bf16.msra.mxu0 %v486
    %660 = vmatprep.subr.bf16.mxu0 0
    %661 = vmatpush1.bf16.msra.mxu0 %v485
    %662 = vmatprep.subr.bf16.mxu0 0
    %663 = vmatpush1.bf16.msra.mxu0 %v484
    %664 = vmatprep.subr.bf16.mxu0 0
    %665 = vmatpush1.bf16.msra.mxu0 %v483
    %666 = vmatprep.subr.bf16.mxu0 0
    %667 = vmatpush1.bf16.msra.mxu0 %v482
    %668 = vmatprep.subr.bf16.mxu0 0
    %669 = vmatpush1.bf16.msra.mxu0 %v481
    %670 = vmatprep.subr.bf16.mxu0 0
    %671 = vmatpush1.bf16.msra.mxu0 %v480
    %672 = vmatprep.subr.bf16.mxu0 0
    %673 = vmatpush2.bf16.msra.mxu0 %v495
    %674 = vmatprep.subr.bf16.mxu0 0
    %675 = vmatpush2.bf16.msra.mxu0 %v494
    %676 = vmatprep.subr.bf16.mxu0 0
    %677 = vmatpush2.bf16.msra.mxu0 %v493
    %678 = vmatprep.subr.bf16.mxu0 0
    %679 = vmatpush2.bf16.msra.mxu0 %v492
    %680 = vmatprep.subr.bf16.mxu0 0
    %681 = vmatpush2.bf16.msra.mxu0 %v491
    %682 = vmatprep.subr.bf16.mxu0 0
    %683 = vmatpush2.bf16.msra.mxu0 %v490
    %684 = vmatprep.subr.bf16.mxu0 0
    %685 = vmatpush2.bf16.msra.mxu0 %v489
    %686 = vmatprep.subr.bf16.mxu0 0
    %687 = vmatpush2.bf16.msra.mxu0 %v488
    %688 = vmatprep.mubr.bf16.mxu0 %v54
    %689 = vmatmul.mubr.bf16.gmra.mxu0 %v53
    %v690 = vpop.f32.mrf.mxu0
    %v691 = vadd.f32 %v651, %v690
    %v692 = vpop.f32.mrf.mxu0
    %v693 = vpop.f32.mrf.mxu0
    %v694 = vpop.f32.mrf.mxu0
    %695 = vdwg.mxu0
    %696 = vmatprep.subr.bf16.mxu0 0
    %697 = vmatpush1.bf16.msra.mxu0 %v503
    %698 = vmatprep.subr.bf16.mxu0 0
    %699 = vmatpush1.bf16.msra.mxu0 %v502
    %700 = vmatprep.subr.bf16.mxu0 0
    %701 = vmatpush1.bf16.msra.mxu0 %v501
    %702 = vmatprep.subr.bf16.mxu0 0
    %703 = vmatpush1.bf16.msra.mxu0 %v500
    %704 = vmatprep.subr.bf16.mxu0 0
    %705 = vmatpush1.bf16.msra.mxu0 %v499
    %706 = vmatprep.subr.bf16.mxu0 0
    %707 = vmatpush1.bf16.msra.mxu0 %v498
    %708 = vmatprep.subr.bf16.mxu0 0
    %709 = vmatpush1.bf16.msra.mxu0 %v497
    %710 = vmatprep.subr.bf16.mxu0 0
    %711 = vmatpush1.bf16.msra.mxu0 %v496
    %712 = vmatprep.subr.bf16.mxu0 0
    %713 = vmatpush2.bf16.msra.mxu0 %v511
    %714 = vmatprep.subr.bf16.mxu0 0
    %715 = vmatpush2.bf16.msra.mxu0 %v510
    %716 = vmatprep.subr.bf16.mxu0 0
    %717 = vmatpush2.bf16.msra.mxu0 %v509
    %718 = vmatprep.subr.bf16.mxu0 0
    %719 = vmatpush2.bf16.msra.mxu0 %v508
    %720 = vmatprep.subr.bf16.mxu0 0
    %721 = vmatpush2.bf16.msra.mxu0 %v507
    %722 = vmatprep.subr.bf16.mxu0 0
    %723 = vmatpush2.bf16.msra.mxu0 %v506
    %724 = vmatprep.subr.bf16.mxu0 0
    %725 = vmatpush2.bf16.msra.mxu0 %v505
    %726 = vmatprep.subr.bf16.mxu0 0
    %727 = vmatpush2.bf16.msra.mxu0 %v504
    %728 = vmatprep.mubr.bf16.mxu0 %v56
    %729 = vmatmul.mubr.bf16.gmra.mxu0 %v55
    %v730 = vpop.f32.mrf.mxu0
    %v731 = vadd.f32 %v691, %v730
    %v732 = vpop.f32.mrf.mxu0
    %v733 = vpop.f32.mrf.mxu0
    %v734 = vpop.f32.mrf.mxu0
    %735 = vdwg.mxu0
    %v736 = vmax.f32 %v731, 0.0
    %v737 = vpack.c.bf16 %v736, %v736
    %v738 = vld [vmem:[%s3] sm:$0xf]
    %v739 = vld [vmem:[%s3 + $0x4] sm:$0xf]
    %v740 = vld [vmem:[%s3 + $0x8] sm:$0xf]
    %v741 = vld [vmem:[%s3 + $0xc] sm:$0xf]
    %v742 = vld [vmem:[%s3 + $0x10] sm:$0xf]
    %v743 = vld [vmem:[%s3 + $0x14] sm:$0xf]
    %v744 = vld [vmem:[%s3 + $0x18] sm:$0xf]
    %v745 = vld [vmem:[%s3 + $0x1c] sm:$0xf]
    %v746 = vld [vmem:[%s3 + $0x20] sm:$0xf]
    %v747 = vld [vmem:[%s3 + $0x24] sm:$0xf]
    %v748 = vld [vmem:[%s3 + $0x28] sm:$0xf]
    %v749 = vld [vmem:[%s3 + $0x2c] sm:$0xf]
    %v750 = vld [vmem:[%s3 + $0x30] sm:$0xf]
    %v751 = vld [vmem:[%s3 + $0x34] sm:$0xf]
    %v752 = vld [vmem:[%s3 + $0x38] sm:$0xf]
    %v753 = vld [vmem:[%s3 + $0x3c] sm:$0xf]
    %v754 = vld [vmem:[%s4] sm:$0x1]
    %v756 = vlaneseq
    %v757 = vshrl.u32 %v756, 7
    %v758 = vsub.s32 0, %v757
    %v759 = vrot.slane %v754, %v758
    %v777 = vunpack.c.l.b16 %v738
    %v778 = vunpack.c.l.b16 %v739
    %v779 = vunpack.c.l.b16 %v740
    %v780 = vunpack.c.l.b16 %v741
    %v781 = vunpack.c.l.b16 %v742
    %v782 = vunpack.c.l.b16 %v743
    %v783 = vunpack.c.l.b16 %v744
    %v784 = vunpack.c.l.b16 %v745
    %v785 = vunpack.c.l.b16 %v746
    %v786 = vunpack.c.l.b16 %v747
    %v787 = vunpack.c.l.b16 %v748
    %v788 = vunpack.c.l.b16 %v749
    %v789 = vunpack.c.l.b16 %v750
    %v790 = vunpack.c.l.b16 %v751
    %v791 = vunpack.c.l.b16 %v752
    %v792 = vunpack.c.l.b16 %v753
    %v793 = vpack.c.b16 %v778, %v777
    %v794 = vpack.c.b16 %v780, %v779
    %v795 = vpack.c.b16 %v782, %v781
    %v796 = vpack.c.b16 %v784, %v783
    %v797 = vpack.c.b16 %v786, %v785
    %v798 = vpack.c.b16 %v788, %v787
    %v799 = vpack.c.b16 %v790, %v789
    %v800 = vpack.c.b16 %v792, %v791
    %809 = vmatprep.subr.bf16.mxu0 0
    %810 = vmatpush1.bf16.msra.mxu0 %v800
    %811 = vmatprep.subr.bf16.mxu0 0
    %812 = vmatpush1.bf16.msra.mxu0 %v799
    %813 = vmatprep.subr.bf16.mxu0 0
    %814 = vmatpush1.bf16.msra.mxu0 %v798
    %815 = vmatprep.subr.bf16.mxu0 0
    %816 = vmatpush1.bf16.msra.mxu0 %v797
    %817 = vmatprep.subr.bf16.mxu0 0
    %818 = vmatpush1.bf16.msra.mxu0 %v796
    %819 = vmatprep.subr.bf16.mxu0 0
    %820 = vmatpush1.bf16.msra.mxu0 %v795
    %821 = vmatprep.subr.bf16.mxu0 0
    %822 = vmatpush1.bf16.msra.mxu0 %v794
    %823 = vmatprep.subr.bf16.mxu0 0
    %824 = vmatpush1.bf16.msra.mxu0 %v793
    %825 = vmatprep.subr.bf16.mxu0 0
    %826 = vmatpush2.bf16.msra.mxu0 0
    %827 = vmatprep.subr.bf16.mxu0 0
    %828 = vmatpush2.bf16.msra.mxu0 0
    %829 = vmatprep.subr.bf16.mxu0 0
    %830 = vmatpush2.bf16.msra.mxu0 0
    %831 = vmatprep.subr.bf16.mxu0 0
    %832 = vmatpush2.bf16.msra.mxu0 0
    %833 = vmatprep.subr.bf16.mxu0 0
    %834 = vmatpush2.bf16.msra.mxu0 0
    %835 = vmatprep.subr.bf16.mxu0 0
    %836 = vmatpush2.bf16.msra.mxu0 0
    %837 = vmatprep.subr.bf16.mxu0 0
    %838 = vmatpush2.bf16.msra.mxu0 0
    %839 = vmatprep.subr.bf16.mxu0 0
    %840 = vmatpush2.bf16.msra.mxu0 0
    %841 = vmatprep.mubr.bf16.mxu0 0
    %842 = vmatmul.mubr.bf16.gmra.mxu0 %v737
    %v843 = vpop.f32.mrf.mxu0
    %v844 = vadd.f32 %v759, %v843
    %v845 = vpop.f32.mrf.mxu0
    %v846 = vpop.f32.mrf.mxu0
    %v847 = vpop.f32.mrf.mxu0
    %848 = vdwg.mxu0
    %v849 = vmax.f32 %v844, 0.0
    %v850 = vpack.c.bf16 %v849, %v849
    %v851 = vld [vmem:[%s5] sm:$0xff]
    %v852 = vld [vmem:[%s5 + $0x8] sm:$0xff]
    %v853 = vld [vmem:[%s5 + $0x10] sm:$0xff]
    %v854 = vld [vmem:[%s5 + $0x18] sm:$0xff]
    %v855 = vld [vmem:[%s5 + $0x20] sm:$0xff]
    %v856 = vld [vmem:[%s5 + $0x28] sm:$0xff]
    %v857 = vld [vmem:[%s5 + $0x30] sm:$0xff]
    %v858 = vld [vmem:[%s5 + $0x38] sm:$0xff]
    %v859 = vld [vmem:[%s5 + $0x40] sm:$0xff]
    %v860 = vld [vmem:[%s5 + $0x48] sm:$0xff]
    %v861 = vld [vmem:[%s5 + $0x50] sm:$0xff]
    %v862 = vld [vmem:[%s5 + $0x58] sm:$0xff]
    %v863 = vld [vmem:[%s5 + $0x60] sm:$0xff]
    %v864 = vld [vmem:[%s5 + $0x68] sm:$0xff]
    %v865 = vld [vmem:[%s5 + $0x70] sm:$0xff]
    %v866 = vld [vmem:[%s5 + $0x78] sm:$0xff]
    %v867 = vld [vmem:[%s6] sm:$0x3]
    %v869 = vlaneseq
    %v870 = vshrl.u32 %v869, 7
    %v871 = vsub.s32 0, %v870
    %v872 = vrot.slane %v867, %v871
    %v873 = vlaneseq
    %v874 = vshrl.u32 %v873, 7
    %v875 = vsub.s32 1, %v874
    %v876 = vrot.slane %v867, %v875
    %v895 = vunpack.c.l.b16 %v851
    %v896 = vunpack.c.h.b16 %v851
    %v897 = vunpack.c.l.b16 %v852
    %v898 = vunpack.c.h.b16 %v852
    %v899 = vunpack.c.l.b16 %v853
    %v900 = vunpack.c.h.b16 %v853
    %v901 = vunpack.c.l.b16 %v854
    %v902 = vunpack.c.h.b16 %v854
    %v903 = vunpack.c.l.b16 %v855
    %v904 = vunpack.c.h.b16 %v855
    %v905 = vunpack.c.l.b16 %v856
    %v906 = vunpack.c.h.b16 %v856
    %v907 = vunpack.c.l.b16 %v857
    %v908 = vunpack.c.h.b16 %v857
    %v909 = vunpack.c.l.b16 %v858
    %v910 = vunpack.c.h.b16 %v858
    %v911 = vunpack.c.l.b16 %v859
    %v912 = vunpack.c.h.b16 %v859
    %v913 = vunpack.c.l.b16 %v860
    %v914 = vunpack.c.h.b16 %v860
    %v915 = vunpack.c.l.b16 %v861
    %v916 = vunpack.c.h.b16 %v861
    %v917 = vunpack.c.l.b16 %v862
    %v918 = vunpack.c.h.b16 %v862
    %v919 = vunpack.c.l.b16 %v863
    %v920 = vunpack.c.h.b16 %v863
    %v921 = vunpack.c.l.b16 %v864
    %v922 = vunpack.c.h.b16 %v864
    %v923 = vunpack.c.l.b16 %v865
    %v924 = vunpack.c.h.b16 %v865
    %v925 = vunpack.c.l.b16 %v866
    %v926 = vunpack.c.h.b16 %v866
    %v927 = vpack.c.b16 %v897, %v895
    %v928 = vpack.c.b16 %v898, %v896
    %v929 = vpack.c.b16 %v901, %v899
    %v930 = vpack.c.b16 %v902, %v900
    %v931 = vpack.c.b16 %v905, %v903
    %v932 = vpack.c.b16 %v906, %v904
    %v933 = vpack.c.b16 %v909, %v907
    %v934 = vpack.c.b16 %v910, %v908
    %v935 = vpack.c.b16 %v913, %v911
    %v936 = vpack.c.b16 %v914, %v912
    %v937 = vpack.c.b16 %v917, %v915
    %v938 = vpack.c.b16 %v918, %v916
    %v939 = vpack.c.b16 %v921, %v919
    %v940 = vpack.c.b16 %v922, %v920
    %v941 = vpack.c.b16 %v925, %v923
    %v942 = vpack.c.b16 %v926, %v924
    %959 = vmatprep.subr.bf16.mxu0 %v942
    %960 = vmatpush1.bf16.msra.mxu0 %v941
    %961 = vmatprep.subr.bf16.mxu0 %v940
    %962 = vmatpush1.bf16.msra.mxu0 %v939
    %963 = vmatprep.subr.bf16.mxu0 %v938
    %964 = vmatpush1.bf16.msra.mxu0 %v937
    %965 = vmatprep.subr.bf16.mxu0 %v936
    %966 = vmatpush1.bf16.msra.mxu0 %v935
    %967 = vmatprep.subr.bf16.mxu0 %v934
    %968 = vmatpush1.bf16.msra.mxu0 %v933
    %969 = vmatprep.subr.bf16.mxu0 %v932
    %970 = vmatpush1.bf16.msra.mxu0 %v931
    %971 = vmatprep.subr.bf16.mxu0 %v930
    %972 = vmatpush1.bf16.msra.mxu0 %v929
    %973 = vmatprep.subr.bf16.mxu0 %v928
    %974 = vmatpush1.bf16.msra.mxu0 %v927
    %975 = vmatprep.subr.bf16.mxu0 0
    %976 = vmatpush2.bf16.msra.mxu0 0
    %977 = vmatprep.subr.bf16.mxu0 0
    %978 = vmatpush2.bf16.msra.mxu0 0
    %979 = vmatprep.subr.bf16.mxu0 0
    %980 = vmatpush2.bf16.msra.mxu0 0
    %981 = vmatprep.subr.bf16.mxu0 0
    %982 = vmatpush2.bf16.msra.mxu0 0
    %983 = vmatprep.subr.bf16.mxu0 0
    %984 = vmatpush2.bf16.msra.mxu0 0
    %985 = vmatprep.subr.bf16.mxu0 0
    %986 = vmatpush2.bf16.msra.mxu0 0
    %987 = vmatprep.subr.bf16.mxu0 0
    %988 = vmatpush2.bf16.msra.mxu0 0
    %989 = vmatprep.subr.bf16.mxu0 0
    %990 = vmatpush2.bf16.msra.mxu0 0
    %991 = vmatprep.mubr.bf16.mxu0 0
    %992 = vmatmul.mubr.bf16.gmra.mxu0 %v850
    %v993 = vpop.f32.mrf.mxu0
    %v994 = vadd.f32 %v872, %v993
    %v995 = vpop.f32.mrf.mxu0
    %v996 = vadd.f32 %v876, %v995
    %v997 = vpop.f32.mrf.mxu0
    %v998 = vpop.f32.mrf.mxu0
    %999 = vdwg.mxu0
    %1000 = vst [vmem:[%s7] sm:$0xff] %v994
    %1001 = vst [vmem:[%s7 + $0x8] sm:$0xff] %v996
    // Predicated region
    $region34: #{fast_net_forward.1} parent=1 // pred_check
      _
    $region35: #{fast_net_forward.1} parent=1 // pred_check_branch
      %1003 = sbr.rel (0) target = $region37
    $region36: #{fast_net_forward.1} parent=1 // pred_region
      _
    $region37: #{fast_net_forward.1} parent=1 // pred_fallthru
      _
    // Predicated region
    $region38: #{fast_net_forward.1} parent=1 // pred_check
      _
    $region39: #{fast_net_forward.1} parent=1 // pred_check_branch
      %1005 = sbr.rel (0) target = $region41
    $region40: #{fast_net_forward.1} parent=1 // pred_region
      _
    $region41: #{fast_net_forward.1} parent=1 // pred_fallthru
      _
    %1006 = vsyncpa [#allocation3], 1

</llo_original>
